<compile_context>
chip_gen: v6e
topology: v6e:2x2x1
jax: 0.10.0
libtpu: 0.0.40
codegen_flags: <defaults>
</compile_context>

<pallas_src>
import functools

import jax
import jax.numpy as jnp
from jax.experimental import pallas as pl
from jax.experimental.pallas import tpu as pltpu


def _mlp_kernel(x_ref, w1_ref, b1_ref, w2_ref, b2_ref, o_ref, *,
                matmul_dtype, precision):
    x = x_ref[...]                               # [TB, D], natural layout
    if x.dtype != matmul_dtype:
        x = x.astype(matmul_dtype)               # in-kernel VPU cast (bf16 path)
    # Layer 1 on the MXU: contract on D for both operands -> [H, TB].
    # Batch stays on the 128-wide lane axis; Mosaic performs the operand
    # transpose in VMEM (XLU), which is free compared to the x DMA.
    h = jax.lax.dot_general(
        w1_ref[...], x,
        dimension_numbers=(((1,), (1,)), ((), ())),
        preferred_element_type=jnp.float32,
        precision=precision)
    # Bias + ReLU on the VPU in f32 (v5e has no bf16 VPU path).
    h = jnp.maximum(h + b1_ref[...], 0.0)
    # Layer 2 (out_features == 1): VPU multiply + XLU sublane reduce.  Avoids
    # an N=1 MXU matmul and yields a lane-dense (1, TB) row (unmasked vst).
    out = jnp.sum(h * w2_ref[...], axis=0, keepdims=True) + b2_ref[...]
    o_ref[...] = out.astype(o_ref.dtype)


def _choose_block_b(batch, in_dim, itemsize):
    """Batch tile: ~2 MiB of x per grid step, multiple of 128, >= 2 blocks."""
    if batch <= 128:
        return batch                              # single full-extent block
    target = (2 << 20) // max(1, in_dim * itemsize)
    bb = max(128, min(8192, (target // 128) * 128))
    # Keep at least two grid blocks so the "parallel" batch axis can shard
    # across v7x's two TensorCores.
    half = -(-((batch + 1) // 2) // 128) * 128    # round_up(ceil(B/2), 128)
    return min(bb, max(128, half))


@functools.partial(jax.jit, static_argnames=("block_b", "matmul_dtype"))
def base_model_forward(x, w1, b1, w2, b2, *, block_b=None,
                       matmul_dtype=jnp.float32):
    """Fused forward pass of the regression MLP.

    Args:
      x:  [B, D] input batch (natural PyTorch layout).
      w1: [H, D] first Linear weight (PyTorch [out, in] layout).
      b1: [H]    first Linear bias.
      w2: [1, H] second Linear weight.
      b2: [1]    second Linear bias.
      block_b: batch tile size (None -> auto: ~2 MiB of x per step).
      matmul_dtype: layer-1 matmul input dtype (f32, or bf16 for the MXU fast
        path on v6e/v7x; the x cast happens inside the kernel).

    Returns:
      [B, 1] regression values (same dtype as x).
    """
    B, D = x.shape
    H = w1.shape[0]
    matmul_dtype = jnp.dtype(matmul_dtype)

    if block_b is None:
        block_b = _choose_block_b(B, D, x.dtype.itemsize)
    n_blocks = pl.cdiv(B, block_b)

    # Resident parameters (tiny): PyTorch layouts reshaped for the kernel.
    w1c = w1.astype(matmul_dtype)                        # [H, D]
    b1c = b1.reshape(H, 1).astype(jnp.float32)           # [H, 1]
    w2c = w2.reshape(H, 1).astype(jnp.float32)           # [H, 1]
    b2c = jnp.asarray(b2, jnp.float32).reshape(1, 1)     # [1, 1]

    precision = (jax.lax.Precision.HIGHEST if matmul_dtype == jnp.float32
                 else jax.lax.Precision.DEFAULT)

    elt_x = x.dtype.itemsize
    elt_mm = matmul_dtype.itemsize
    elt_o = x.dtype.itemsize
    cost = pl.CostEstimate(
        flops=2 * B * D * H + 4 * B * H,
        transcendentals=0,
        bytes_accessed=(B * D * elt_x + H * D * elt_mm
                        + (2 * H + 1) * 4 + B * elt_o),
    )

    # Explicit VMEM budget: double-buffered x/out tiles + resident params +
    # layer-1 intermediates, with 2x headroom.  Keeps the bigger batch tile
    # compiling on v5e (16 MiB scoped default) and within v7x's 64 MiB VMEM.
    scratch_est = (2 * block_b * D * elt_x        # double-buffered x tile
                   + 2 * block_b * elt_o          # double-buffered out row
                   + H * D * elt_mm + (2 * H + 1) * 4   # resident params
                   + 3 * H * block_b * 4          # layer-1 intermediates
                   + block_b * D * 4)             # cast / transpose temp
    vmem_limit = int(min(64 << 20, max(32 << 20, 2 * scratch_est)))

    kernel = functools.partial(_mlp_kernel, matmul_dtype=matmul_dtype,
                               precision=precision)

    out_row = pl.pallas_call(
        kernel,
        out_shape=jax.ShapeDtypeStruct((1, B), x.dtype),
        grid_spec=pltpu.PrefetchScalarGridSpec(
            num_scalar_prefetch=0,
            grid=(n_blocks,),
            in_specs=[
                # x in its natural [B, D] layout, one batch tile per step.
                pl.BlockSpec((block_b, D), lambda i: (i, 0)),
                # Parameters map to block (0, 0) every step -> stay resident
                # in VMEM across the whole grid (no per-step re-DMA).
                # TODO(synk): pipeline_mode=pl.Buffered(1) could halve their
                # (already tiny) VMEM footprint for large H*D; skipped here
                # for compile safety at these shapes.
                pl.BlockSpec((H, D), lambda i: (0, 0)),   # w1
                pl.BlockSpec((H, 1), lambda i: (0, 0)),   # b1
                pl.BlockSpec((H, 1), lambda i: (0, 0)),   # w2
                pl.BlockSpec((1, 1), lambda i: (0, 0)),   # b2
            ],
            out_specs=pl.BlockSpec((1, block_b), lambda i: (0, i)),
        ),
        compiler_params=pltpu.CompilerParams(
            dimension_semantics=("parallel",),
            vmem_limit_bytes=vmem_limit),
        cost_estimate=cost,
    )(x, w1c, b1c, w2c, b2c)

    # Back to the PyTorch output layout: [B, 1] (layout plumbing only).
    return out_row.reshape(B, 1)


# TODO(synk): fit / evaluate / optimizer / LR-scheduler logic is host-side
# training orchestration with no Pallas equivalent; only forward() is a kernel.


if __name__ == "__main__":
    # Small shapes consistent with the module: input_dim=32, hidden=64, out=1.
    # B=384 is not a multiple of the auto-chosen 256-row batch tile, so it
    # exercises the ragged-last-block path and a 2-step grid (both v7x TCs).
    B, D, H, OUT = 384, 32, 64, 1

    key = jax.random.PRNGKey(0)
    kx, kw1, kb1, kw2, kb2 = jax.random.split(key, 5)

    # Deterministic parameter init (PyTorch-Linear-style uniform bounds),
    # PyTorch [out, in] weight layout.
    bound1 = 1.0 / (D ** 0.5)
    bound2 = 1.0 / (H ** 0.5)
    x = jax.random.normal(kx, (B, D), dtype=jnp.float32)
    w1 = jax.random.uniform(kw1, (H, D), jnp.float32, -bound1, bound1)
    b1 = jax.random.uniform(kb1, (H,), jnp.float32, -bound1, bound1)
    w2 = jax.random.uniform(kw2, (OUT, H), jnp.float32, -bound2, bound2)
    b2 = jax.random.uniform(kb2, (OUT,), jnp.float32, -bound2, bound2)

    # f32 path.
    y = jax.block_until_ready(base_model_forward(x, w1, b1, w2, b2))

    # Pure-JAX reference (same semantics as the PyTorch forward).
    hi = jax.lax.Precision.HIGHEST
    ref_h = jnp.maximum(jnp.dot(x, w1.T, precision=hi) + b1, 0.0)
    ref = jnp.dot(ref_h, w2.T, precision=hi) + b2
    assert y.shape == (B, OUT)
    assert jnp.allclose(y, ref, atol=1e-3, rtol=1e-3), (
        float(jnp.max(jnp.abs(y - ref))))

    # bf16 matmul-input path (in-kernel cast, f32 accumulation) -- looser
    # tolerance vs the f32 reference is expected (input quantization).
    y_bf16 = jax.block_until_ready(
        base_model_forward(x, w1, b1, w2, b2, matmul_dtype=jnp.bfloat16))
    assert y_bf16.shape == (B, OUT)
    assert jnp.allclose(y_bf16, ref, atol=5e-2, rtol=5e-2), (
        float(jnp.max(jnp.abs(y_bf16 - ref))))

    print("KERNEL_OK")
</pallas_src>

<mosaic_0001>
module attributes {stable_mosaic.version = 11 : i64} {
  func.func @_mlp_kernel(%arg0: i32, %arg1: memref<256x32xf32, #tpu.memory_space<vmem>>, %arg2: memref<64x32xf32, #tpu.memory_space<vmem>>, %arg3: memref<64x1xf32, #tpu.memory_space<vmem>>, %arg4: memref<64x1xf32, #tpu.memory_space<vmem>>, %arg5: memref<1x1xf32, #tpu.memory_space<vmem>>, %arg6: memref<1x256xf32, #tpu.memory_space<vmem>>) attributes {dimension_semantics = [#tpu.dimension_semantics<parallel>], iteration_bounds = array<i64: 2>, scalar_prefetch = 0 : i64, scratch_operands = 0 : i64, tpu.core_type = #tpu.core_type<tc>, window_params = [{transform_indices = @transform_0, window_bounds = array<i64: 256, 32>}, {pipeline_mode = #tpu.pipeline_mode<synchronous>, transform_indices = @transform_1, window_bounds = array<i64: 64, 32>}, {pipeline_mode = #tpu.pipeline_mode<synchronous>, transform_indices = @transform_2, window_bounds = array<i64: 64, 1>}, {pipeline_mode = #tpu.pipeline_mode<synchronous>, transform_indices = @transform_3, window_bounds = array<i64: 64, 1>}, {pipeline_mode = #tpu.pipeline_mode<synchronous>, transform_indices = @transform_4, window_bounds = array<i64: 1, 1>}, {transform_indices = @transform_5, window_bounds = array<i64: 1, 256>}]} {
    %c0 = arith.constant 0 : index
    %c0_0 = arith.constant 0 : index
    %0 = vector.load %arg1[%c0, %c0_0] : memref<256x32xf32, #tpu.memory_space<vmem>>, vector<256x32xf32>
    %c0_1 = arith.constant 0 : index
    %c0_2 = arith.constant 0 : index
    %1 = vector.load %arg2[%c0_1, %c0_2] : memref<64x32xf32, #tpu.memory_space<vmem>>, vector<64x32xf32>
    %cst = arith.constant dense<0.000000e+00> : vector<64x256xf32>
    %2 = tpu.matmul %1, %0, %cst {dimension_numbers = #tpu.dot_dimension_numbers<[1], [1], [0], [0], [0, 0, 1, 0], [], []>, precision = #tpu.contract_precision<fp32>} : vector<64x32xf32>, vector<256x32xf32>, vector<64x256xf32> -> vector<64x256xf32>
    %c0_3 = arith.constant 0 : index
    %c0_4 = arith.constant 0 : index
    %3 = vector.load %arg3[%c0_3, %c0_4] : memref<64x1xf32, #tpu.memory_space<vmem>>, vector<64x1xf32>
    %4 = vector.broadcast %3 : vector<64x1xf32> to vector<64x256xf32>
    %5 = arith.addf %2, %4 : vector<64x256xf32>
    %cst_5 = arith.constant 0.000000e+00 : f32
    %6 = vector.broadcast %cst_5 : f32 to vector<64x256xf32>
    %7 = arith.maximumf %5, %6 : vector<64x256xf32>
    %c0_6 = arith.constant 0 : index
    %c0_7 = arith.constant 0 : index
    %8 = vector.load %arg4[%c0_6, %c0_7] : memref<64x1xf32, #tpu.memory_space<vmem>>, vector<64x1xf32>
    %9 = vector.broadcast %8 : vector<64x1xf32> to vector<64x256xf32>
    %10 = arith.mulf %7, %9 : vector<64x256xf32>
    %cst_8 = arith.constant dense<0.000000e+00> : vector<256xf32>
    %11 = vector.multi_reduction <add>, %10, %cst_8 [0] : vector<64x256xf32> to vector<256xf32>
    %12 = vector.shape_cast %11 : vector<256xf32> to vector<1x256xf32>
    %c0_9 = arith.constant 0 : index
    %c0_10 = arith.constant 0 : index
    %13 = vector.load %arg5[%c0_9, %c0_10] : memref<1x1xf32, #tpu.memory_space<vmem>>, vector<1x1xf32>
    %14 = vector.broadcast %13 : vector<1x1xf32> to vector<1x256xf32>
    %15 = arith.addf %12, %14 : vector<1x256xf32>
    %c0_11 = arith.constant 0 : index
    %c0_12 = arith.constant 0 : index
    %16 = vector.load %arg6[%c0_11, %c0_12] : memref<1x256xf32, #tpu.memory_space<vmem>>, vector<1x256xf32>
    tpu.vector_store %arg6[%c0_11, %c0_12], %15 {strides = array<i32>} : memref<1x256xf32, #tpu.memory_space<vmem>>, vector<1x256xf32>,
    return
  }
  func.func @transform_0(%arg0: i32) -> (i32, i32) {
    %c0_i32 = arith.constant 0 : i32
    %c0_i32_0 = arith.constant 0 : i32
    return %arg0, %c0_i32 : i32, i32
  }
  func.func @transform_1(%arg0: i32) -> (i32, i32) {
    %c0_i32 = arith.constant 0 : i32
    %c0_i32_0 = arith.constant 0 : i32
    %c0_i32_1 = arith.constant 0 : i32
    return %c0_i32, %c0_i32_0 : i32, i32
  }
  func.func @transform_2(%arg0: i32) -> (i32, i32) {
    %c0_i32 = arith.constant 0 : i32
    %c0_i32_0 = arith.constant 0 : i32
    %c0_i32_1 = arith.constant 0 : i32
    return %c0_i32, %c0_i32_0 : i32, i32
  }
  func.func @transform_3(%arg0: i32) -> (i32, i32) {
    %c0_i32 = arith.constant 0 : i32
    %c0_i32_0 = arith.constant 0 : i32
    %c0_i32_1 = arith.constant 0 : i32
    return %c0_i32, %c0_i32_0 : i32, i32
  }
  func.func @transform_4(%arg0: i32) -> (i32, i32) {
    %c0_i32 = arith.constant 0 : i32
    %c0_i32_0 = arith.constant 0 : i32
    %c0_i32_1 = arith.constant 0 : i32
    return %c0_i32, %c0_i32_0 : i32, i32
  }
  func.func @transform_5(%arg0: i32) -> (i32, i32) {
    %c0_i32 = arith.constant 0 : i32
    %c0_i32_0 = arith.constant 0 : i32
    return %c0_i32, %arg0 : i32, i32
  }
}

</mosaic_0001>

<llo_original>
// kernel: base_model_forward.1
$region0: #{base_model_forward.1}
  #allocation0 [shape = 'u32[]', space=smem, size = 0x4, offset = 0x4, fixed_abs, tag = 'smem constant byte address 0x4 - core index']
  #allocation1 [shape = 'u32[144,128]{1,0:T(1,128)}', space=vmem, size = 0x12000, scoped, tag = 'internal scratch']
  #allocation2 [shape = 'f32[1,1]{1,0:T(1,128)S(1)}', space=vmem, size = 0x200, scoped, tag = 'scoped memory for base_model_forward.1']
  %s0 = inlined_call_operand.vmem [shape: f32[384,32], index: 0, kind: input, shape index: {}]
  %s1 = inlined_call_operand.vmem [shape: f32[64,32], index: 1, kind: input, shape index: {}]
  %s2 = inlined_call_operand.vmem [shape: f32[64,1], index: 2, kind: input, shape index: {}]
  %s3 = inlined_call_operand.vmem [shape: f32[64,1], index: 3, kind: input, shape index: {}]
  %s4 = inlined_call_operand.<no memory space> [shape: f32[1,1], index: 4, kind: input, shape index: {}]
  %s5 = inlined_call_operand.hbm [shape: f32[1,384], index: 5, kind: output, shape index: {}]
  %s6 = sld [smem:[#allocation0]]
  $region53: #{base_model_forward.1} parent=0
    _
  %s8 = ssub.s32 1, %s6
  %s9 = scalar_select 0, %s8, %s6
  %v10 = vstv %s4
  %11 = vst [vmem:[#allocation2] sm:$0x1] %v10
  $region1: #{base_model_forward.1} parent=0
    #allocation3 [shape = 'u8[2048]{0}', space=vmem, size = 0x800, scoped, tag = 'output window, operand 0']
    #allocation4 [shape = 's32[2]{0}', space=sflag, size = 0x8, scoped, tag = 'scoped memory for base_model_forward.1']
    %12 = vsyncpa [#allocation4], 0
    %s13 = scalar_lea.sflag [#allocation4], 1
    %14 = vsyncpa %s13, 0
    loop: start=0, step=1, limit=4
    $region2: #{base_model_forward.1} parent=1 // loop_pre_header
      _
    $region3: #{base_model_forward.1} parent=1 // loop_header
      %s16 = sphi 0, %s20
      %p17 = scmp.ge.s32.totalorder %s16, 4
      %s26 = sphi 0, %s28
      %s29 = sphi 0, %s26
      %s30 = sphi 0, %s29
      %s46 = sphi 0, %s30
      %s50 = sphi 0, %s50
      %s52 = sphi 0, %s50
      %s53 = sphi 0, %s52
      %s67 = sphi 0, %s53
      %s71 = sphi 0, %s71
      %s73 = sphi 0, %s71
      %s74 = sphi 0, %s73
      %s88 = sphi 0, %s74
      %s92 = sphi 0, %s92
      %s94 = sphi 0, %s92
      %s95 = sphi 0, %s94
      %s109 = sphi 0, %s95
      %s113 = sphi 0, %s113
      %s115 = sphi 0, %s113
      %s116 = sphi 0, %s115
      %s130 = sphi 0, %s116
      %s136 = sphi 0, %s138
      %s139 = sphi 0, %s136
      %s140 = sphi 0, %s139
      %s156 = sphi 0, %s140
    $region4: #{base_model_forward.1} parent=1 // loop_header_branch
      %19 = sbr.rel (%p17) target = $region8
    $region5: #{base_model_forward.1} parent=1 // loop_body
      %s21 = ssub.s32 %s16, 1
      %s22 = ssub.s32 %s16, 2
      %s23 = sadd.s32 %s16, 1
      %s24 = ssub.s32 %s16, %s23
      %p25 = scmp.eq.s32.totalorder %s24, 0
      %s27 = sadd.s32 %s26, 1
      %s28 = scalar_select %p25, %s26, %s27
      %p31 = pneg %p25
      %p32 = scmp.eq.s32.totalorder %s16, 1
      %p33 = por %p31, %p32
      %p34 = scmp.ne.s32.totalorder %s26, %s29
      %p35 = scmp.eq.s32.totalorder %s16, 0
      %p36 = por %p34, %p35
      %p37 = scmp.ne.s32.totalorder %s26, %s29
      %p38 = scmp.eq.s32.totalorder %s21, 1
      %p39 = por %p37, %p38
      %p40 = scmp.ne.s32.totalorder %s29, %s30
      %p41 = scmp.eq.s32.totalorder %s21, 0
      %p42 = por %p40, %p41
      %p43 = scmp.ne.s32.totalorder %s29, %s30
      %p44 = scmp.eq.s32.totalorder %s22, 1
      %p45 = por %p43, %p44
      %p47 = scmp.ne.s32.totalorder %s30, %s46
      %p48 = scmp.eq.s32.totalorder %s22, 0
      %p49 = por %p47, %p48
      %s51 = sadd.s32 %s50, 1
      %p54 = scmp.eq.s32.totalorder %s16, 1
      %p55 = scmp.ne.s32.totalorder %s50, %s52
      %p56 = scmp.eq.s32.totalorder %s16, 0
      %p57 = por %p55, %p56
      %p58 = scmp.ne.s32.totalorder %s50, %s52
      %p59 = scmp.eq.s32.totalorder %s21, 1
      %p60 = por %p58, %p59
      %p61 = scmp.ne.s32.totalorder %s52, %s53
      %p62 = scmp.eq.s32.totalorder %s21, 0
      %p63 = por %p61, %p62
      %p64 = scmp.ne.s32.totalorder %s52, %s53
      %p65 = scmp.eq.s32.totalorder %s22, 1
      %p66 = por %p64, %p65
      %p68 = scmp.ne.s32.totalorder %s53, %s67
      %p69 = scmp.eq.s32.totalorder %s22, 0
      %p70 = por %p68, %p69
      %s72 = sadd.s32 %s71, 1
      %p75 = scmp.eq.s32.totalorder %s16, 1
      %p76 = scmp.ne.s32.totalorder %s71, %s73
      %p77 = scmp.eq.s32.totalorder %s16, 0
      %p78 = por %p76, %p77
      %p79 = scmp.ne.s32.totalorder %s71, %s73
      %p80 = scmp.eq.s32.totalorder %s21, 1
      %p81 = por %p79, %p80
      %p82 = scmp.ne.s32.totalorder %s73, %s74
      %p83 = scmp.eq.s32.totalorder %s21, 0
      %p84 = por %p82, %p83
      %p85 = scmp.ne.s32.totalorder %s73, %s74
      %p86 = scmp.eq.s32.totalorder %s22, 1
      %p87 = por %p85, %p86
      %p89 = scmp.ne.s32.totalorder %s74, %s88
      %p90 = scmp.eq.s32.totalorder %s22, 0
      %p91 = por %p89, %p90
      %s93 = sadd.s32 %s92, 1
      %p96 = scmp.eq.s32.totalorder %s16, 1
      %p97 = scmp.ne.s32.totalorder %s92, %s94
      %p98 = scmp.eq.s32.totalorder %s16, 0
      %p99 = por %p97, %p98
      %p100 = scmp.ne.s32.totalorder %s92, %s94
      %p101 = scmp.eq.s32.totalorder %s21, 1
      %p102 = por %p100, %p101
      %p103 = scmp.ne.s32.totalorder %s94, %s95
      %p104 = scmp.eq.s32.totalorder %s21, 0
      %p105 = por %p103, %p104
      %p106 = scmp.ne.s32.totalorder %s94, %s95
      %p107 = scmp.eq.s32.totalorder %s22, 1
      %p108 = por %p106, %p107
      %p110 = scmp.ne.s32.totalorder %s95, %s109
      %p111 = scmp.eq.s32.totalorder %s22, 0
      %p112 = por %p110, %p111
      %s114 = sadd.s32 %s113, 1
      %p117 = scmp.eq.s32.totalorder %s16, 1
      %p118 = scmp.ne.s32.totalorder %s113, %s115
      %p119 = scmp.eq.s32.totalorder %s16, 0
      %p120 = por %p118, %p119
      %p121 = scmp.ne.s32.totalorder %s113, %s115
      %p122 = scmp.eq.s32.totalorder %s21, 1
      %p123 = por %p121, %p122
      %p124 = scmp.ne.s32.totalorder %s115, %s116
      %p125 = scmp.eq.s32.totalorder %s21, 0
      %p126 = por %p124, %p125
      %p127 = scmp.ne.s32.totalorder %s115, %s116
      %p128 = scmp.eq.s32.totalorder %s22, 1
      %p129 = por %p127, %p128
      %p131 = scmp.ne.s32.totalorder %s116, %s130
      %p132 = scmp.eq.s32.totalorder %s22, 0
      %p133 = por %p131, %p132
      %s134 = ssub.s32 %s16, %s23
      %p135 = scmp.eq.s32.totalorder %s134, 0
      %s137 = sadd.s32 %s136, 1
      %s138 = scalar_select %p135, %s136, %s137
      %p141 = pneg %p135
      %p142 = scmp.eq.s32.totalorder %s16, 1
      %p143 = por %p141, %p142
      %p144 = scmp.ne.s32.totalorder %s136, %s139
      %p145 = scmp.eq.s32.totalorder %s16, 0
      %p146 = por %p144, %p145
      %p147 = scmp.ne.s32.totalorder %s136, %s139
      %p148 = scmp.eq.s32.totalorder %s21, 1
      %p149 = por %p147, %p148
      %p150 = scmp.ne.s32.totalorder %s139, %s140
      %p151 = scmp.eq.s32.totalorder %s21, 0
      %p152 = por %p150, %p151
      %p153 = scmp.ne.s32.totalorder %s139, %s140
      %p154 = scmp.eq.s32.totalorder %s22, 1
      %p155 = por %p153, %p154
      %p157 = scmp.ne.s32.totalorder %s140, %s156
      %p158 = scmp.eq.s32.totalorder %s22, 0
      %p159 = por %p157, %p158
      %p160 = scmp.le.s32.totalorder 1, %s16
      %p161 = scmp.lt.s32.totalorder %s16, 3
      %p162 = pnand %p160, %p161
      %p163 = pneg %p162
      // Predicated region
      $region9: #{base_model_forward.1} parent=5 // pred_check
        _
      $region10: #{base_model_forward.1} parent=5 // pred_check_branch
        %165 = sbr.rel (%p162) target = $region12
      $region11: #{base_model_forward.1} parent=5 // pred_region
        %s166 = ssub.s32 %s16, 1
        // Predicated region
        $region13: #{base_model_forward.1} parent=11 // pred_check
          %p167 = pneg %p63
        $region14: #{base_model_forward.1} parent=11 // pred_check_branch
          %169 = sbr.rel (%p167) target = $region16
        $region15: #{base_model_forward.1} parent=11 // pred_region
          _
        $region16: #{base_model_forward.1} parent=11 // pred_fallthru
          _
        // Predicated region
        $region17: #{base_model_forward.1} parent=11 // pred_check
          %p170 = pneg %p84
        $region18: #{base_model_forward.1} parent=11 // pred_check_branch
          %172 = sbr.rel (%p170) target = $region20
        $region19: #{base_model_forward.1} parent=11 // pred_region
          _
        $region20: #{base_model_forward.1} parent=11 // pred_fallthru
          _
        // Predicated region
        $region21: #{base_model_forward.1} parent=11 // pred_check
          %p173 = pneg %p105
        $region22: #{base_model_forward.1} parent=11 // pred_check_branch
          %175 = sbr.rel (%p173) target = $region24
        $region23: #{base_model_forward.1} parent=11 // pred_region
          _
        $region24: #{base_model_forward.1} parent=11 // pred_fallthru
          _
        // Predicated region
        $region25: #{base_model_forward.1} parent=11 // pred_check
          %p176 = pneg %p126
        $region26: #{base_model_forward.1} parent=11 // pred_check_branch
          %178 = sbr.rel (%p176) target = $region28
        $region27: #{base_model_forward.1} parent=11 // pred_region
          _
        $region28: #{base_model_forward.1} parent=11 // pred_fallthru
          _
      $region12: #{base_model_forward.1} parent=5 // pred_fallthru
        _
      %p179 = scmp.lt.s32.totalorder %s16, 2
      // Predicated region
      $region29: #{base_model_forward.1} parent=5 // pred_check
        %p180 = pneg %p179
      $region30: #{base_model_forward.1} parent=5 // pred_check_branch
        %182 = sbr.rel (%p180) target = $region32
      $region31: #{base_model_forward.1} parent=5 // pred_region
        // Predicated region
        $region33: #{base_model_forward.1} parent=31 // pred_check
          %p183 = pneg %p36
        $region34: #{base_model_forward.1} parent=31 // pred_check_branch
          %185 = sbr.rel (%p183) target = $region36
        $region35: #{base_model_forward.1} parent=31 // pred_region
          %s186 = smul.u32 32, %s16
          %s187 = ssub.s32 48, %s186
          %p188 = scmp.lt.s32.totalorder %s187, 32
          %s189 = scalar_select %p188, %s187, 32
          %s190 = smul.u32 128, %s189
          %p191 = scmp.lt.s32.totalorder %s186, 47
          %s192 = scalar_select %p191, %s186, 47
          %s193 = smul.addr %s192, 8
          %s194 = scalar_lea.vmem %s0, %s193
          %s195 = smul.u32 32, %s16
          %s196 = ssub.s32 48, %s195
          %p197 = scmp.lt.s32.totalorder %s196, 32
          %s198 = scalar_select %p197, %s196, 32
          %s199 = smul.u32 128, %s198
        $region36: #{base_model_forward.1} parent=31 // pred_fallthru
          _
      $region32: #{base_model_forward.1} parent=5 // pred_fallthru
        _
      %p200 = scmp.le.s32.totalorder 1, %s16
      %p201 = scmp.lt.s32.totalorder %s16, 3
      %p202 = pnand %p200, %p201
      %p203 = pneg %p202
      // Predicated region
      $region37: #{base_model_forward.1} parent=5 // pred_check
        _
      $region38: #{base_model_forward.1} parent=5 // pred_check_branch
        %205 = sbr.rel (%p202) target = $region40
      $region39: #{base_model_forward.1} parent=5 // pred_region
        %s206 = ssub.s32 %s16, 1
        %s207 = smul.u32 32, %s21
        %s208 = ssub.s32 48, %s207
        %p209 = scmp.lt.s32.totalorder %s208, 32
        %s210 = scalar_select %p209, %s208, 32
        %s211 = smul.u32 128, %s210
        %p212 = scmp.lt.s32.totalorder %s207, 47
        %s213 = scalar_select %p212, %s207, 47
        %s214 = smul.addr %s213, 8
        %s215 = scalar_lea.vmem %s0, %s214
        %p216 = pneg %p42
        %p217 = pneg %p39
        %p218 = pneg %p63
        %p219 = pneg %p60
        %p220 = pneg %p84
        %p221 = pneg %p81
        %p222 = pneg %p105
        %p223 = pneg %p102
        %p224 = pneg %p126
        %p225 = pneg %p123
        %p226 = pneg %p152
        %p227 = pneg %p149
        %s228 = sand.u32 %s139, 1
        %s229 = scalar_lea.sflag [#allocation4], %s228
        %s230 = sand.u32 %s139, 1
        %s231 = smul.addr %s230, 2
        %s232 = scalar_lea.vmem [#allocation3], %s231
        %s233 = smul.u32 32, %s21
        %s234 = ssub.s32 48, %s233
        %p235 = scmp.lt.s32.totalorder %s234, 32
        %s236 = scalar_select %p235, %s234, 32
        %s237 = smul.u32 128, %s236
        %p238 = scmp.lt.s32.totalorder %s233, 47
        %s239 = scalar_select %p238, %s233, 47
        %s240 = smul.addr %s239, 8
        %s241 = scalar_lea.vmem %s0, %s240
        %s242 = smul.u32 32, %s21
        %s243 = ssub.s32 48, %s242
        %p244 = scmp.lt.s32.totalorder %s243, 32
        %s245 = scalar_select %p244, %s243, 32
        %s246 = smul.u32 128, %s245
        %s247 = smul.u32 2, %s21
        %s248 = ssub.s32 3, %s247
        %p249 = scmp.lt.s32.totalorder %s248, 2
        %s250 = scalar_select %p249, %s248, 2
        %s251 = smul.u32 16, %s250
        %v252 = vld [vmem:[%s241] sm:$0xff]
        %v253 = vld [vmem:[%s241 + $0x8] sm:$0xff]
        %v254 = vld [vmem:[%s241 + $0x10] sm:$0xff]
        %v255 = vld [vmem:[%s241 + $0x18] sm:$0xff]
        %v256 = vld [vmem:[%s241 + $0x20] sm:$0xff]
        %v257 = vld [vmem:[%s241 + $0x28] sm:$0xff]
        %v258 = vld [vmem:[%s241 + $0x30] sm:$0xff]
        %v259 = vld [vmem:[%s241 + $0x38] sm:$0xff]
        %v260 = vld [vmem:[%s241 + $0x40] sm:$0xff]
        %v261 = vld [vmem:[%s241 + $0x48] sm:$0xff]
        %v262 = vld [vmem:[%s241 + $0x50] sm:$0xff]
        %v263 = vld [vmem:[%s241 + $0x58] sm:$0xff]
        %v264 = vld [vmem:[%s241 + $0x60] sm:$0xff]
        %v265 = vld [vmem:[%s241 + $0x68] sm:$0xff]
        %v266 = vld [vmem:[%s241 + $0x70] sm:$0xff]
        %v267 = vld [vmem:[%s241 + $0x78] sm:$0xff]
        %v268 = vld [vmem:[%s241 + $0x80] sm:$0xff]
        %v269 = vld [vmem:[%s241 + $0x88] sm:$0xff]
        %v270 = vld [vmem:[%s241 + $0x90] sm:$0xff]
        %v271 = vld [vmem:[%s241 + $0x98] sm:$0xff]
        %v272 = vld [vmem:[%s241 + $0xa0] sm:$0xff]
        %v273 = vld [vmem:[%s241 + $0xa8] sm:$0xff]
        %v274 = vld [vmem:[%s241 + $0xb0] sm:$0xff]
        %v275 = vld [vmem:[%s241 + $0xb8] sm:$0xff]
        %v276 = vld [vmem:[%s241 + $0xc0] sm:$0xff]
        %v277 = vld [vmem:[%s241 + $0xc8] sm:$0xff]
        %v278 = vld [vmem:[%s241 + $0xd0] sm:$0xff]
        %v279 = vld [vmem:[%s241 + $0xd8] sm:$0xff]
        %v280 = vld [vmem:[%s241 + $0xe0] sm:$0xff]
        %v281 = vld [vmem:[%s241 + $0xe8] sm:$0xff]
        %v282 = vld [vmem:[%s241 + $0xf0] sm:$0xff]
        %v283 = vld [vmem:[%s241 + $0xf8] sm:$0xff]
        %v284 = vld [vmem:[%s1] sm:$0xff]
        %v285 = vld [vmem:[%s1 + $0x8] sm:$0xff]
        %v286 = vld [vmem:[%s1 + $0x10] sm:$0xff]
        %v287 = vld [vmem:[%s1 + $0x18] sm:$0xff]
        %v288 = vld [vmem:[%s1 + $0x20] sm:$0xff]
        %v289 = vld [vmem:[%s1 + $0x28] sm:$0xff]
        %v290 = vld [vmem:[%s1 + $0x30] sm:$0xff]
        %v291 = vld [vmem:[%s1 + $0x38] sm:$0xff]
        %v292 = vld [vmem:[%s2] sm:$0xff]
        %v293 = vld [vmem:[%s2 + $0x8] sm:$0xff]
        %v294 = vld [vmem:[%s2 + $0x10] sm:$0xff]
        %v295 = vld [vmem:[%s2 + $0x18] sm:$0xff]
        %v296 = vld [vmem:[%s2 + $0x20] sm:$0xff]
        %v297 = vld [vmem:[%s2 + $0x28] sm:$0xff]
        %v298 = vld [vmem:[%s2 + $0x30] sm:$0xff]
        %v299 = vld [vmem:[%s2 + $0x38] sm:$0xff]
        %301 = vset.pattern.permute.xlu0 0
        %302 = vperm.xlu0 %301, %v292
        %v303 = vpop.permute.xlu0 %302
        %306 = vset.pattern.permute.xlu0 0
        %307 = vperm.xlu0 %306, %v293
        %v308 = vpop.permute.xlu0 %307
        %311 = vset.pattern.permute.xlu0 0
        %312 = vperm.xlu0 %311, %v294
        %v313 = vpop.permute.xlu0 %312
        %316 = vset.pattern.permute.xlu0 0
        %317 = vperm.xlu0 %316, %v295
        %v318 = vpop.permute.xlu0 %317
        %321 = vset.pattern.permute.xlu0 0
        %322 = vperm.xlu0 %321, %v296
        %v323 = vpop.permute.xlu0 %322
        %326 = vset.pattern.permute.xlu0 0
        %327 = vperm.xlu0 %326, %v297
        %v328 = vpop.permute.xlu0 %327
        %331 = vset.pattern.permute.xlu0 0
        %332 = vperm.xlu0 %331, %v298
        %v333 = vpop.permute.xlu0 %332
        %336 = vset.pattern.permute.xlu0 0
        %337 = vperm.xlu0 %336, %v299
        %v338 = vpop.permute.xlu0 %337
        %vm340 = vcmask 261120
        %v342 = vsel %vm340, %v284, 0
        %v345 = vsel %vm340, %v285, 0
        %v348 = vsel %vm340, %v286, 0
        %v351 = vsel %vm340, %v287, 0
        %v354 = vsel %vm340, %v288, 0
        %v357 = vsel %vm340, %v289, 0
        %v360 = vsel %vm340, %v290, 0
        %v363 = vsel %vm340, %v291, 0
        %v366 = vsel %vm340, %v252, 0
        %v369 = vsel %vm340, %v253, 0
        %v372 = vsel %vm340, %v254, 0
        %v375 = vsel %vm340, %v255, 0
        %v378 = vsel %vm340, %v256, 0
        %v381 = vsel %vm340, %v257, 0
        %v384 = vsel %vm340, %v258, 0
        %v387 = vsel %vm340, %v259, 0
        %v390 = vsel %vm340, %v260, 0
        %v393 = vsel %vm340, %v261, 0
        %v396 = vsel %vm340, %v262, 0
        %v399 = vsel %vm340, %v263, 0
        %v402 = vsel %vm340, %v264, 0
        %v405 = vsel %vm340, %v265, 0
        %v408 = vsel %vm340, %v266, 0
        %v411 = vsel %vm340, %v267, 0
        %v414 = vsel %vm340, %v268, 0
        %v417 = vsel %vm340, %v269, 0
        %v420 = vsel %vm340, %v270, 0
        %v423 = vsel %vm340, %v271, 0
        %v426 = vsel %vm340, %v272, 0
        %v429 = vsel %vm340, %v273, 0
        %v432 = vsel %vm340, %v274, 0
        %v435 = vsel %vm340, %v275, 0
        %v438 = vsel %vm340, %v276, 0
        %v441 = vsel %vm340, %v277, 0
        %v444 = vsel %vm340, %v278, 0
        %v447 = vsel %vm340, %v279, 0
        %v450 = vsel %vm340, %v280, 0
        %v453 = vsel %vm340, %v281, 0
        %v456 = vsel %vm340, %v282, 0
        %v459 = vsel %vm340, %v283, 0
        %461 = vmatprep.subr.mxu0 0.0
        %v462 = vand.u32 %v411, 4294901760
        %463 = vmatpush1.xpose.msra.mxu0 %v462
        %464 = vmatprep.subr.mxu0 0.0
        %v465 = vand.u32 %v408, 4294901760
        %466 = vmatpush1.xpose.msra.mxu0 %v465
        %467 = vmatprep.subr.mxu0 0.0
        %v468 = vand.u32 %v405, 4294901760
        %469 = vmatpush1.xpose.msra.mxu0 %v468
        %470 = vmatprep.subr.mxu0 0.0
        %v471 = vand.u32 %v402, 4294901760
        %472 = vmatpush1.xpose.msra.mxu0 %v471
        %473 = vmatprep.subr.mxu0 0.0
        %v474 = vand.u32 %v399, 4294901760
        %475 = vmatpush1.xpose.msra.mxu0 %v474
        %476 = vmatprep.subr.mxu0 0.0
        %v477 = vand.u32 %v396, 4294901760
        %478 = vmatpush1.xpose.msra.mxu0 %v477
        %479 = vmatprep.subr.mxu0 0.0
        %v480 = vand.u32 %v393, 4294901760
        %481 = vmatpush1.xpose.msra.mxu0 %v480
        %482 = vmatprep.subr.mxu0 0.0
        %v483 = vand.u32 %v390, 4294901760
        %484 = vmatpush1.xpose.msra.mxu0 %v483
        %485 = vmatprep.subr.mxu0 0.0
        %v486 = vand.u32 %v387, 4294901760
        %487 = vmatpush1.xpose.msra.mxu0 %v486
        %488 = vmatprep.subr.mxu0 0.0
        %v489 = vand.u32 %v384, 4294901760
        %490 = vmatpush1.xpose.msra.mxu0 %v489
        %491 = vmatprep.subr.mxu0 0.0
        %v492 = vand.u32 %v381, 4294901760
        %493 = vmatpush1.xpose.msra.mxu0 %v492
        %494 = vmatprep.subr.mxu0 0.0
        %v495 = vand.u32 %v378, 4294901760
        %496 = vmatpush1.xpose.msra.mxu0 %v495
        %497 = vmatprep.subr.mxu0 0.0
        %v498 = vand.u32 %v375, 4294901760
        %499 = vmatpush1.xpose.msra.mxu0 %v498
        %500 = vmatprep.subr.mxu0 0.0
        %v501 = vand.u32 %v372, 4294901760
        %502 = vmatpush1.xpose.msra.mxu0 %v501
        %503 = vmatprep.subr.mxu0 0.0
        %v504 = vand.u32 %v369, 4294901760
        %505 = vmatpush1.xpose.msra.mxu0 %v504
        %506 = vmatprep.subr.mxu0 0.0
        %v507 = vand.u32 %v366, 4294901760
        %508 = vmatpush1.xpose.msra.mxu0 %v507
        %509 = vmatprep.subr.mxu0 0.0
        %v510 = vand.u32 %v459, 4294901760
        %511 = vmatpush2.xpose.msra.mxu0 %v510
        %512 = vmatprep.subr.mxu0 0.0
        %v513 = vand.u32 %v456, 4294901760
        %514 = vmatpush2.xpose.msra.mxu0 %v513
        %515 = vmatprep.subr.mxu0 0.0
        %v516 = vand.u32 %v453, 4294901760
        %517 = vmatpush2.xpose.msra.mxu0 %v516
        %518 = vmatprep.subr.mxu0 0.0
        %v519 = vand.u32 %v450, 4294901760
        %520 = vmatpush2.xpose.msra.mxu0 %v519
        %521 = vmatprep.subr.mxu0 0.0
        %v522 = vand.u32 %v447, 4294901760
        %523 = vmatpush2.xpose.msra.mxu0 %v522
        %524 = vmatprep.subr.mxu0 0.0
        %v525 = vand.u32 %v444, 4294901760
        %526 = vmatpush2.xpose.msra.mxu0 %v525
        %527 = vmatprep.subr.mxu0 0.0
        %v528 = vand.u32 %v441, 4294901760
        %529 = vmatpush2.xpose.msra.mxu0 %v528
        %530 = vmatprep.subr.mxu0 0.0
        %v531 = vand.u32 %v438, 4294901760
        %532 = vmatpush2.xpose.msra.mxu0 %v531
        %533 = vmatprep.subr.mxu0 0.0
        %v534 = vand.u32 %v435, 4294901760
        %535 = vmatpush2.xpose.msra.mxu0 %v534
        %536 = vmatprep.subr.mxu0 0.0
        %v537 = vand.u32 %v432, 4294901760
        %538 = vmatpush2.xpose.msra.mxu0 %v537
        %539 = vmatprep.subr.mxu0 0.0
        %v540 = vand.u32 %v429, 4294901760
        %541 = vmatpush2.xpose.msra.mxu0 %v540
        %542 = vmatprep.subr.mxu0 0.0
        %v543 = vand.u32 %v426, 4294901760
        %544 = vmatpush2.xpose.msra.mxu0 %v543
        %545 = vmatprep.subr.mxu0 0.0
        %v546 = vand.u32 %v423, 4294901760
        %547 = vmatpush2.xpose.msra.mxu0 %v546
        %548 = vmatprep.subr.mxu0 0.0
        %v549 = vand.u32 %v420, 4294901760
        %550 = vmatpush2.xpose.msra.mxu0 %v549
        %551 = vmatprep.subr.mxu0 0.0
        %v552 = vand.u32 %v417, 4294901760
        %553 = vmatpush2.xpose.msra.mxu0 %v552
        %554 = vmatprep.subr.mxu0 0.0
        %v555 = vand.u32 %v414, 4294901760
        %556 = vmatpush2.xpose.msra.mxu0 %v555
        %557 = vmatprep.mubr.f32.mxu0 0.0
        %v558 = vand.u32 %v342, 4294901760
        %v559 = vsub.f32 %v342, %v558
        %v560 = vand.u32 %v559, 4294901760
        %v561 = vsub.f32 %v559, %v560
        %v562 = vand.u32 %v561, 4294901760
        %563 = vmatmul.mubr.f32.gmra.mxu0 %v562
        %v564 = vpop.f32.mrf.mxu0
        %v565 = vadd.f32 %v303, %v564
        %v566 = vpop.f32.mrf.mxu0
        %v567 = vadd.f32 %v303, %v566
        %568 = vmatprep.mubr.f32.mxu0 0.0
        %v569 = vand.u32 %v345, 4294901760
        %v570 = vsub.f32 %v345, %v569
        %v571 = vand.u32 %v570, 4294901760
        %v572 = vsub.f32 %v570, %v571
        %v573 = vand.u32 %v572, 4294901760
        %574 = vmatmul.mubr.f32.gmra.mxu0 %v573
        %v575 = vpop.f32.mrf.mxu0
        %v576 = vadd.f32 %v308, %v575
        %v577 = vpop.f32.mrf.mxu0
        %v578 = vadd.f32 %v308, %v577
        %579 = vmatprep.mubr.f32.mxu0 0.0
        %v580 = vand.u32 %v348, 4294901760
        %v581 = vsub.f32 %v348, %v580
        %v582 = vand.u32 %v581, 4294901760
        %v583 = vsub.f32 %v581, %v582
        %v584 = vand.u32 %v583, 4294901760
        %585 = vmatmul.mubr.f32.gmra.mxu0 %v584
        %v586 = vpop.f32.mrf.mxu0
        %v587 = vadd.f32 %v313, %v586
        %v588 = vpop.f32.mrf.mxu0
        %v589 = vadd.f32 %v313, %v588
        %590 = vmatprep.mubr.f32.mxu0 0.0
        %v591 = vand.u32 %v351, 4294901760
        %v592 = vsub.f32 %v351, %v591
        %v593 = vand.u32 %v592, 4294901760
        %v594 = vsub.f32 %v592, %v593
        %v595 = vand.u32 %v594, 4294901760
        %596 = vmatmul.mubr.f32.gmra.mxu0 %v595
        %v597 = vpop.f32.mrf.mxu0
        %v598 = vadd.f32 %v318, %v597
        %v599 = vpop.f32.mrf.mxu0
        %v600 = vadd.f32 %v318, %v599
        %601 = vmatprep.mubr.f32.mxu0 0.0
        %v602 = vand.u32 %v354, 4294901760
        %v603 = vsub.f32 %v354, %v602
        %v604 = vand.u32 %v603, 4294901760
        %v605 = vsub.f32 %v603, %v604
        %v606 = vand.u32 %v605, 4294901760
        %607 = vmatmul.mubr.f32.gmra.mxu0 %v606
        %v608 = vpop.f32.mrf.mxu0
        %v609 = vadd.f32 %v323, %v608
        %v610 = vpop.f32.mrf.mxu0
        %v611 = vadd.f32 %v323, %v610
        %612 = vmatprep.mubr.f32.mxu0 0.0
        %v613 = vand.u32 %v357, 4294901760
        %v614 = vsub.f32 %v357, %v613
        %v615 = vand.u32 %v614, 4294901760
        %v616 = vsub.f32 %v614, %v615
        %v617 = vand.u32 %v616, 4294901760
        %618 = vmatmul.mubr.f32.gmra.mxu0 %v617
        %v619 = vpop.f32.mrf.mxu0
        %v620 = vadd.f32 %v328, %v619
        %v621 = vpop.f32.mrf.mxu0
        %v622 = vadd.f32 %v328, %v621
        %623 = vmatprep.mubr.f32.mxu0 0.0
        %v624 = vand.u32 %v360, 4294901760
        %v625 = vsub.f32 %v360, %v624
        %v626 = vand.u32 %v625, 4294901760
        %v627 = vsub.f32 %v625, %v626
        %v628 = vand.u32 %v627, 4294901760
        %629 = vmatmul.mubr.f32.gmra.mxu0 %v628
        %v630 = vpop.f32.mrf.mxu0
        %v631 = vadd.f32 %v333, %v630
        %v632 = vpop.f32.mrf.mxu0
        %v633 = vadd.f32 %v333, %v632
        %634 = vmatprep.mubr.f32.mxu0 0.0
        %v635 = vand.u32 %v363, 4294901760
        %v636 = vsub.f32 %v363, %v635
        %v637 = vand.u32 %v636, 4294901760
        %v638 = vsub.f32 %v636, %v637
        %v639 = vand.u32 %v638, 4294901760
        %640 = vmatmul.mubr.f32.gmra.mxu0 %v639
        %v641 = vpop.f32.mrf.mxu0
        %v642 = vadd.f32 %v338, %v641
        %v643 = vpop.f32.mrf.mxu0
        %v644 = vadd.f32 %v338, %v643
        %645 = vdwg.mxu0
        %646 = vmatprep.subr.mxu0 0.0
        %v647 = vand.u32 %v411, 4294901760
        %v648 = vsub.f32 %v411, %v647
        %v649 = vand.u32 %v648, 4294901760
        %v650 = vsub.f32 %v648, %v649
        %v651 = vand.u32 %v650, 4294901760
        %652 = vmatpush1.xpose.msra.mxu0 %v651
        %653 = vmatprep.subr.mxu0 0.0
        %v654 = vand.u32 %v408, 4294901760
        %v655 = vsub.f32 %v408, %v654
        %v656 = vand.u32 %v655, 4294901760
        %v657 = vsub.f32 %v655, %v656
        %v658 = vand.u32 %v657, 4294901760
        %659 = vmatpush1.xpose.msra.mxu0 %v658
        %660 = vmatprep.subr.mxu0 0.0
        %v661 = vand.u32 %v405, 4294901760
        %v662 = vsub.f32 %v405, %v661
        %v663 = vand.u32 %v662, 4294901760
        %v664 = vsub.f32 %v662, %v663
        %v665 = vand.u32 %v664, 4294901760
        %666 = vmatpush1.xpose.msra.mxu0 %v665
        %667 = vmatprep.subr.mxu0 0.0
        %v668 = vand.u32 %v402, 4294901760
        %v669 = vsub.f32 %v402, %v668
        %v670 = vand.u32 %v669, 4294901760
        %v671 = vsub.f32 %v669, %v670
        %v672 = vand.u32 %v671, 4294901760
        %673 = vmatpush1.xpose.msra.mxu0 %v672
        %674 = vmatprep.subr.mxu0 0.0
        %v675 = vand.u32 %v399, 4294901760
        %v676 = vsub.f32 %v399, %v675
        %v677 = vand.u32 %v676, 4294901760
        %v678 = vsub.f32 %v676, %v677
        %v679 = vand.u32 %v678, 4294901760
        %680 = vmatpush1.xpose.msra.mxu0 %v679
        %681 = vmatprep.subr.mxu0 0.0
        %v682 = vand.u32 %v396, 4294901760
        %v683 = vsub.f32 %v396, %v682
        %v684 = vand.u32 %v683, 4294901760
        %v685 = vsub.f32 %v683, %v684
        %v686 = vand.u32 %v685, 4294901760
        %687 = vmatpush1.xpose.msra.mxu0 %v686
        %688 = vmatprep.subr.mxu0 0.0
        %v689 = vand.u32 %v393, 4294901760
        %v690 = vsub.f32 %v393, %v689
        %v691 = vand.u32 %v690, 4294901760
        %v692 = vsub.f32 %v690, %v691
        %v693 = vand.u32 %v692, 4294901760
        %694 = vmatpush1.xpose.msra.mxu0 %v693
        %695 = vmatprep.subr.mxu0 0.0
        %v696 = vand.u32 %v390, 4294901760
        %v697 = vsub.f32 %v390, %v696
        %v698 = vand.u32 %v697, 4294901760
        %v699 = vsub.f32 %v697, %v698
        %v700 = vand.u32 %v699, 4294901760
        %701 = vmatpush1.xpose.msra.mxu0 %v700
        %702 = vmatprep.subr.mxu0 0.0
        %v703 = vand.u32 %v387, 4294901760
        %v704 = vsub.f32 %v387, %v703
        %v705 = vand.u32 %v704, 4294901760
        %v706 = vsub.f32 %v704, %v705
        %v707 = vand.u32 %v706, 4294901760
        %708 = vmatpush1.xpose.msra.mxu0 %v707
        %709 = vmatprep.subr.mxu0 0.0
        %v710 = vand.u32 %v384, 4294901760
        %v711 = vsub.f32 %v384, %v710
        %v712 = vand.u32 %v711, 4294901760
        %v713 = vsub.f32 %v711, %v712
        %v714 = vand.u32 %v713, 4294901760
        %715 = vmatpush1.xpose.msra.mxu0 %v714
        %716 = vmatprep.subr.mxu0 0.0
        %v717 = vand.u32 %v381, 4294901760
        %v718 = vsub.f32 %v381, %v717
        %v719 = vand.u32 %v718, 4294901760
        %v720 = vsub.f32 %v718, %v719
        %v721 = vand.u32 %v720, 4294901760
        %722 = vmatpush1.xpose.msra.mxu0 %v721
        %723 = vmatprep.subr.mxu0 0.0
        %v724 = vand.u32 %v378, 4294901760
        %v725 = vsub.f32 %v378, %v724
        %v726 = vand.u32 %v725, 4294901760
        %v727 = vsub.f32 %v725, %v726
        %v728 = vand.u32 %v727, 4294901760
        %729 = vmatpush1.xpose.msra.mxu0 %v728
        %730 = vmatprep.subr.mxu0 0.0
        %v731 = vand.u32 %v375, 4294901760
        %v732 = vsub.f32 %v375, %v731
        %v733 = vand.u32 %v732, 4294901760
        %v734 = vsub.f32 %v732, %v733
        %v735 = vand.u32 %v734, 4294901760
        %736 = vmatpush1.xpose.msra.mxu0 %v735
        %737 = vmatprep.subr.mxu0 0.0
        %v738 = vand.u32 %v372, 4294901760
        %v739 = vsub.f32 %v372, %v738
        %v740 = vand.u32 %v739, 4294901760
        %v741 = vsub.f32 %v739, %v740
        %v742 = vand.u32 %v741, 4294901760
        %743 = vmatpush1.xpose.msra.mxu0 %v742
        %744 = vmatprep.subr.mxu0 0.0
        %v745 = vand.u32 %v369, 4294901760
        %v746 = vsub.f32 %v369, %v745
        %v747 = vand.u32 %v746, 4294901760
        %v748 = vsub.f32 %v746, %v747
        %v749 = vand.u32 %v748, 4294901760
        %750 = vmatpush1.xpose.msra.mxu0 %v749
        %751 = vmatprep.subr.mxu0 0.0
        %v752 = vand.u32 %v366, 4294901760
        %v753 = vsub.f32 %v366, %v752
        %v754 = vand.u32 %v753, 4294901760
        %v755 = vsub.f32 %v753, %v754
        %v756 = vand.u32 %v755, 4294901760
        %757 = vmatpush1.xpose.msra.mxu0 %v756
        %758 = vmatprep.subr.mxu0 0.0
        %v759 = vand.u32 %v459, 4294901760
        %v760 = vsub.f32 %v459, %v759
        %v761 = vand.u32 %v760, 4294901760
        %v762 = vsub.f32 %v760, %v761
        %v763 = vand.u32 %v762, 4294901760
        %764 = vmatpush2.xpose.msra.mxu0 %v763
        %765 = vmatprep.subr.mxu0 0.0
        %v766 = vand.u32 %v456, 4294901760
        %v767 = vsub.f32 %v456, %v766
        %v768 = vand.u32 %v767, 4294901760
        %v769 = vsub.f32 %v767, %v768
        %v770 = vand.u32 %v769, 4294901760
        %771 = vmatpush2.xpose.msra.mxu0 %v770
        %772 = vmatprep.subr.mxu0 0.0
        %v773 = vand.u32 %v453, 4294901760
        %v774 = vsub.f32 %v453, %v773
        %v775 = vand.u32 %v774, 4294901760
        %v776 = vsub.f32 %v774, %v775
        %v777 = vand.u32 %v776, 4294901760
        %778 = vmatpush2.xpose.msra.mxu0 %v777
        %779 = vmatprep.subr.mxu0 0.0
        %v780 = vand.u32 %v450, 4294901760
        %v781 = vsub.f32 %v450, %v780
        %v782 = vand.u32 %v781, 4294901760
        %v783 = vsub.f32 %v781, %v782
        %v784 = vand.u32 %v783, 4294901760
        %785 = vmatpush2.xpose.msra.mxu0 %v784
        %786 = vmatprep.subr.mxu0 0.0
        %v787 = vand.u32 %v447, 4294901760
        %v788 = vsub.f32 %v447, %v787
        %v789 = vand.u32 %v788, 4294901760
        %v790 = vsub.f32 %v788, %v789
        %v791 = vand.u32 %v790, 4294901760
        %792 = vmatpush2.xpose.msra.mxu0 %v791
        %793 = vmatprep.subr.mxu0 0.0
        %v794 = vand.u32 %v444, 4294901760
        %v795 = vsub.f32 %v444, %v794
        %v796 = vand.u32 %v795, 4294901760
        %v797 = vsub.f32 %v795, %v796
        %v798 = vand.u32 %v797, 4294901760
        %799 = vmatpush2.xpose.msra.mxu0 %v798
        %800 = vmatprep.subr.mxu0 0.0
        %v801 = vand.u32 %v441, 4294901760
        %v802 = vsub.f32 %v441, %v801
        %v803 = vand.u32 %v802, 4294901760
        %v804 = vsub.f32 %v802, %v803
        %v805 = vand.u32 %v804, 4294901760
        %806 = vmatpush2.xpose.msra.mxu0 %v805
        %807 = vmatprep.subr.mxu0 0.0
        %v808 = vand.u32 %v438, 4294901760
        %v809 = vsub.f32 %v438, %v808
        %v810 = vand.u32 %v809, 4294901760
        %v811 = vsub.f32 %v809, %v810
        %v812 = vand.u32 %v811, 4294901760
        %813 = vmatpush2.xpose.msra.mxu0 %v812
        %814 = vmatprep.subr.mxu0 0.0
        %v815 = vand.u32 %v435, 4294901760
        %v816 = vsub.f32 %v435, %v815
        %v817 = vand.u32 %v816, 4294901760
        %v818 = vsub.f32 %v816, %v817
        %v819 = vand.u32 %v818, 4294901760
        %820 = vmatpush2.xpose.msra.mxu0 %v819
        %821 = vmatprep.subr.mxu0 0.0
        %v822 = vand.u32 %v432, 4294901760
        %v823 = vsub.f32 %v432, %v822
        %v824 = vand.u32 %v823, 4294901760
        %v825 = vsub.f32 %v823, %v824
        %v826 = vand.u32 %v825, 4294901760
        %827 = vmatpush2.xpose.msra.mxu0 %v826
        %828 = vmatprep.subr.mxu0 0.0
        %v829 = vand.u32 %v429, 4294901760
        %v830 = vsub.f32 %v429, %v829
        %v831 = vand.u32 %v830, 4294901760
        %v832 = vsub.f32 %v830, %v831
        %v833 = vand.u32 %v832, 4294901760
        %834 = vmatpush2.xpose.msra.mxu0 %v833
        %835 = vmatprep.subr.mxu0 0.0
        %v836 = vand.u32 %v426, 4294901760
        %v837 = vsub.f32 %v426, %v836
        %v838 = vand.u32 %v837, 4294901760
        %v839 = vsub.f32 %v837, %v838
        %v840 = vand.u32 %v839, 4294901760
        %841 = vmatpush2.xpose.msra.mxu0 %v840
        %842 = vmatprep.subr.mxu0 0.0
        %v843 = vand.u32 %v423, 4294901760
        %v844 = vsub.f32 %v423, %v843
        %v845 = vand.u32 %v844, 4294901760
        %v846 = vsub.f32 %v844, %v845
        %v847 = vand.u32 %v846, 4294901760
        %848 = vmatpush2.xpose.msra.mxu0 %v847
        %849 = vmatprep.subr.mxu0 0.0
        %v850 = vand.u32 %v420, 4294901760
        %v851 = vsub.f32 %v420, %v850
        %v852 = vand.u32 %v851, 4294901760
        %v853 = vsub.f32 %v851, %v852
        %v854 = vand.u32 %v853, 4294901760
        %855 = vmatpush2.xpose.msra.mxu0 %v854
        %856 = vmatprep.subr.mxu0 0.0
        %v857 = vand.u32 %v417, 4294901760
        %v858 = vsub.f32 %v417, %v857
        %v859 = vand.u32 %v858, 4294901760
        %v860 = vsub.f32 %v858, %v859
        %v861 = vand.u32 %v860, 4294901760
        %862 = vmatpush2.xpose.msra.mxu0 %v861
        %863 = vmatprep.subr.mxu0 0.0
        %v864 = vand.u32 %v414, 4294901760
        %v865 = vsub.f32 %v414, %v864
        %v866 = vand.u32 %v865, 4294901760
        %v867 = vsub.f32 %v865, %v866
        %v868 = vand.u32 %v867, 4294901760
        %869 = vmatpush2.xpose.msra.mxu0 %v868
        %870 = vmatprep.mubr.f32.mxu0 0.0
        %v871 = vand.u32 %v342, 4294901760
        %872 = vmatmul.mubr.f32.gmra.mxu0 %v871
        %v873 = vpop.f32.mrf.mxu0
        %v874 = vadd.f32 %v565, %v873
        %v875 = vpop.f32.mrf.mxu0
        %v876 = vadd.f32 %v567, %v875
        %877 = vmatprep.mubr.f32.mxu0 0.0
        %v878 = vand.u32 %v345, 4294901760
        %879 = vmatmul.mubr.f32.gmra.mxu0 %v878
        %v880 = vpop.f32.mrf.mxu0
        %v881 = vadd.f32 %v576, %v880
        %v882 = vpop.f32.mrf.mxu0
        %v883 = vadd.f32 %v578, %v882
        %884 = vmatprep.mubr.f32.mxu0 0.0
        %v885 = vand.u32 %v348, 4294901760
        %886 = vmatmul.mubr.f32.gmra.mxu0 %v885
        %v887 = vpop.f32.mrf.mxu0
        %v888 = vadd.f32 %v587, %v887
        %v889 = vpop.f32.mrf.mxu0
        %v890 = vadd.f32 %v589, %v889
        %891 = vmatprep.mubr.f32.mxu0 0.0
        %v892 = vand.u32 %v351, 4294901760
        %893 = vmatmul.mubr.f32.gmra.mxu0 %v892
        %v894 = vpop.f32.mrf.mxu0
        %v895 = vadd.f32 %v598, %v894
        %v896 = vpop.f32.mrf.mxu0
        %v897 = vadd.f32 %v600, %v896
        %898 = vmatprep.mubr.f32.mxu0 0.0
        %v899 = vand.u32 %v354, 4294901760
        %900 = vmatmul.mubr.f32.gmra.mxu0 %v899
        %v901 = vpop.f32.mrf.mxu0
        %v902 = vadd.f32 %v609, %v901
        %v903 = vpop.f32.mrf.mxu0
        %v904 = vadd.f32 %v611, %v903
        %905 = vmatprep.mubr.f32.mxu0 0.0
        %v906 = vand.u32 %v357, 4294901760
        %907 = vmatmul.mubr.f32.gmra.mxu0 %v906
        %v908 = vpop.f32.mrf.mxu0
        %v909 = vadd.f32 %v620, %v908
        %v910 = vpop.f32.mrf.mxu0
        %v911 = vadd.f32 %v622, %v910
        %912 = vmatprep.mubr.f32.mxu0 0.0
        %v913 = vand.u32 %v360, 4294901760
        %914 = vmatmul.mubr.f32.gmra.mxu0 %v913
        %v915 = vpop.f32.mrf.mxu0
        %v916 = vadd.f32 %v631, %v915
        %v917 = vpop.f32.mrf.mxu0
        %v918 = vadd.f32 %v633, %v917
        %919 = vmatprep.mubr.f32.mxu0 0.0
        %v920 = vand.u32 %v363, 4294901760
        %921 = vmatmul.mubr.f32.gmra.mxu0 %v920
        %v922 = vpop.f32.mrf.mxu0
        %v923 = vadd.f32 %v642, %v922
        %v924 = vpop.f32.mrf.mxu0
        %v925 = vadd.f32 %v644, %v924
        %926 = vdwg.mxu0
        %927 = vmatprep.subr.mxu0 0.0
        %v928 = vand.u32 %v411, 4294901760
        %v929 = vsub.f32 %v411, %v928
        %930 = vmatpush1.xpose.msra.mxu0 %v929
        %931 = vmatprep.subr.mxu0 0.0
        %v932 = vand.u32 %v408, 4294901760
        %v933 = vsub.f32 %v408, %v932
        %934 = vmatpush1.xpose.msra.mxu0 %v933
        %935 = vmatprep.subr.mxu0 0.0
        %v936 = vand.u32 %v405, 4294901760
        %v937 = vsub.f32 %v405, %v936
        %938 = vmatpush1.xpose.msra.mxu0 %v937
        %939 = vmatprep.subr.mxu0 0.0
        %v940 = vand.u32 %v402, 4294901760
        %v941 = vsub.f32 %v402, %v940
        %942 = vmatpush1.xpose.msra.mxu0 %v941
        %943 = vmatprep.subr.mxu0 0.0
        %v944 = vand.u32 %v399, 4294901760
        %v945 = vsub.f32 %v399, %v944
        %946 = vmatpush1.xpose.msra.mxu0 %v945
        %947 = vmatprep.subr.mxu0 0.0
        %v948 = vand.u32 %v396, 4294901760
        %v949 = vsub.f32 %v396, %v948
        %950 = vmatpush1.xpose.msra.mxu0 %v949
        %951 = vmatprep.subr.mxu0 0.0
        %v952 = vand.u32 %v393, 4294901760
        %v953 = vsub.f32 %v393, %v952
        %954 = vmatpush1.xpose.msra.mxu0 %v953
        %955 = vmatprep.subr.mxu0 0.0
        %v956 = vand.u32 %v390, 4294901760
        %v957 = vsub.f32 %v390, %v956
        %958 = vmatpush1.xpose.msra.mxu0 %v957
        %959 = vmatprep.subr.mxu0 0.0
        %v960 = vand.u32 %v387, 4294901760
        %v961 = vsub.f32 %v387, %v960
        %962 = vmatpush1.xpose.msra.mxu0 %v961
        %963 = vmatprep.subr.mxu0 0.0
        %v964 = vand.u32 %v384, 4294901760
        %v965 = vsub.f32 %v384, %v964
        %966 = vmatpush1.xpose.msra.mxu0 %v965
        %967 = vmatprep.subr.mxu0 0.0
        %v968 = vand.u32 %v381, 4294901760
        %v969 = vsub.f32 %v381, %v968
        %970 = vmatpush1.xpose.msra.mxu0 %v969
        %971 = vmatprep.subr.mxu0 0.0
        %v972 = vand.u32 %v378, 4294901760
        %v973 = vsub.f32 %v378, %v972
        %974 = vmatpush1.xpose.msra.mxu0 %v973
        %975 = vmatprep.subr.mxu0 0.0
        %v976 = vand.u32 %v375, 4294901760
        %v977 = vsub.f32 %v375, %v976
        %978 = vmatpush1.xpose.msra.mxu0 %v977
        %979 = vmatprep.subr.mxu0 0.0
        %v980 = vand.u32 %v372, 4294901760
        %v981 = vsub.f32 %v372, %v980
        %982 = vmatpush1.xpose.msra.mxu0 %v981
        %983 = vmatprep.subr.mxu0 0.0
        %v984 = vand.u32 %v369, 4294901760
        %v985 = vsub.f32 %v369, %v984
        %986 = vmatpush1.xpose.msra.mxu0 %v985
        %987 = vmatprep.subr.mxu0 0.0
        %v988 = vand.u32 %v366, 4294901760
        %v989 = vsub.f32 %v366, %v988
        %990 = vmatpush1.xpose.msra.mxu0 %v989
        %991 = vmatprep.subr.mxu0 0.0
        %v992 = vand.u32 %v459, 4294901760
        %v993 = vsub.f32 %v459, %v992
        %994 = vmatpush2.xpose.msra.mxu0 %v993
        %995 = vmatprep.subr.mxu0 0.0
        %v996 = vand.u32 %v456, 4294901760
        %v997 = vsub.f32 %v456, %v996
        %998 = vmatpush2.xpose.msra.mxu0 %v997
        %999 = vmatprep.subr.mxu0 0.0
        %v1000 = vand.u32 %v453, 4294901760
        %v1001 = vsub.f32 %v453, %v1000
        %1002 = vmatpush2.xpose.msra.mxu0 %v1001
        %1003 = vmatprep.subr.mxu0 0.0
        %v1004 = vand.u32 %v450, 4294901760
        %v1005 = vsub.f32 %v450, %v1004
        %1006 = vmatpush2.xpose.msra.mxu0 %v1005
        %1007 = vmatprep.subr.mxu0 0.0
        %v1008 = vand.u32 %v447, 4294901760
        %v1009 = vsub.f32 %v447, %v1008
        %1010 = vmatpush2.xpose.msra.mxu0 %v1009
        %1011 = vmatprep.subr.mxu0 0.0
        %v1012 = vand.u32 %v444, 4294901760
        %v1013 = vsub.f32 %v444, %v1012
        %1014 = vmatpush2.xpose.msra.mxu0 %v1013
        %1015 = vmatprep.subr.mxu0 0.0
        %v1016 = vand.u32 %v441, 4294901760
        %v1017 = vsub.f32 %v441, %v1016
        %1018 = vmatpush2.xpose.msra.mxu0 %v1017
        %1019 = vmatprep.subr.mxu0 0.0
        %v1020 = vand.u32 %v438, 4294901760
        %v1021 = vsub.f32 %v438, %v1020
        %1022 = vmatpush2.xpose.msra.mxu0 %v1021
        %1023 = vmatprep.subr.mxu0 0.0
        %v1024 = vand.u32 %v435, 4294901760
        %v1025 = vsub.f32 %v435, %v1024
        %1026 = vmatpush2.xpose.msra.mxu0 %v1025
        %1027 = vmatprep.subr.mxu0 0.0
        %v1028 = vand.u32 %v432, 4294901760
        %v1029 = vsub.f32 %v432, %v1028
        %1030 = vmatpush2.xpose.msra.mxu0 %v1029
        %1031 = vmatprep.subr.mxu0 0.0
        %v1032 = vand.u32 %v429, 4294901760
        %v1033 = vsub.f32 %v429, %v1032
        %1034 = vmatpush2.xpose.msra.mxu0 %v1033
        %1035 = vmatprep.subr.mxu0 0.0
        %v1036 = vand.u32 %v426, 4294901760
        %v1037 = vsub.f32 %v426, %v1036
        %1038 = vmatpush2.xpose.msra.mxu0 %v1037
        %1039 = vmatprep.subr.mxu0 0.0
        %v1040 = vand.u32 %v423, 4294901760
        %v1041 = vsub.f32 %v423, %v1040
        %1042 = vmatpush2.xpose.msra.mxu0 %v1041
        %1043 = vmatprep.subr.mxu0 0.0
        %v1044 = vand.u32 %v420, 4294901760
        %v1045 = vsub.f32 %v420, %v1044
        %1046 = vmatpush2.xpose.msra.mxu0 %v1045
        %1047 = vmatprep.subr.mxu0 0.0
        %v1048 = vand.u32 %v417, 4294901760
        %v1049 = vsub.f32 %v417, %v1048
        %1050 = vmatpush2.xpose.msra.mxu0 %v1049
        %1051 = vmatprep.subr.mxu0 0.0
        %v1052 = vand.u32 %v414, 4294901760
        %v1053 = vsub.f32 %v414, %v1052
        %1054 = vmatpush2.xpose.msra.mxu0 %v1053
        %1055 = vmatprep.mubr.f32.mxu0 0.0
        %v1056 = vand.u32 %v342, 4294901760
        %v1057 = vsub.f32 %v342, %v1056
        %1058 = vmatmul.mubr.f32.gmra.mxu0 %v1057
        %v1059 = vpop.f32.mrf.mxu0
        %v1060 = vadd.f32 %v874, %v1059
        %v1061 = vpop.f32.mrf.mxu0
        %v1062 = vadd.f32 %v876, %v1061
        %1063 = vmatprep.mubr.f32.mxu0 0.0
        %v1064 = vand.u32 %v345, 4294901760
        %v1065 = vsub.f32 %v345, %v1064
        %1066 = vmatmul.mubr.f32.gmra.mxu0 %v1065
        %v1067 = vpop.f32.mrf.mxu0
        %v1068 = vadd.f32 %v881, %v1067
        %v1069 = vpop.f32.mrf.mxu0
        %v1070 = vadd.f32 %v883, %v1069
        %1071 = vmatprep.mubr.f32.mxu0 0.0
        %v1072 = vand.u32 %v348, 4294901760
        %v1073 = vsub.f32 %v348, %v1072
        %1074 = vmatmul.mubr.f32.gmra.mxu0 %v1073
        %v1075 = vpop.f32.mrf.mxu0
        %v1076 = vadd.f32 %v888, %v1075
        %v1077 = vpop.f32.mrf.mxu0
        %v1078 = vadd.f32 %v890, %v1077
        %1079 = vmatprep.mubr.f32.mxu0 0.0
        %v1080 = vand.u32 %v351, 4294901760
        %v1081 = vsub.f32 %v351, %v1080
        %1082 = vmatmul.mubr.f32.gmra.mxu0 %v1081
        %v1083 = vpop.f32.mrf.mxu0
        %v1084 = vadd.f32 %v895, %v1083
        %v1085 = vpop.f32.mrf.mxu0
        %v1086 = vadd.f32 %v897, %v1085
        %1087 = vmatprep.mubr.f32.mxu0 0.0
        %v1088 = vand.u32 %v354, 4294901760
        %v1089 = vsub.f32 %v354, %v1088
        %1090 = vmatmul.mubr.f32.gmra.mxu0 %v1089
        %v1091 = vpop.f32.mrf.mxu0
        %v1092 = vadd.f32 %v902, %v1091
        %v1093 = vpop.f32.mrf.mxu0
        %v1094 = vadd.f32 %v904, %v1093
        %1095 = vmatprep.mubr.f32.mxu0 0.0
        %v1096 = vand.u32 %v357, 4294901760
        %v1097 = vsub.f32 %v357, %v1096
        %1098 = vmatmul.mubr.f32.gmra.mxu0 %v1097
        %v1099 = vpop.f32.mrf.mxu0
        %v1100 = vadd.f32 %v909, %v1099
        %v1101 = vpop.f32.mrf.mxu0
        %v1102 = vadd.f32 %v911, %v1101
        %1103 = vmatprep.mubr.f32.mxu0 0.0
        %v1104 = vand.u32 %v360, 4294901760
        %v1105 = vsub.f32 %v360, %v1104
        %1106 = vmatmul.mubr.f32.gmra.mxu0 %v1105
        %v1107 = vpop.f32.mrf.mxu0
        %v1108 = vadd.f32 %v916, %v1107
        %v1109 = vpop.f32.mrf.mxu0
        %v1110 = vadd.f32 %v918, %v1109
        %1111 = vmatprep.mubr.f32.mxu0 0.0
        %v1112 = vand.u32 %v363, 4294901760
        %v1113 = vsub.f32 %v363, %v1112
        %1114 = vmatmul.mubr.f32.gmra.mxu0 %v1113
        %v1115 = vpop.f32.mrf.mxu0
        %v1116 = vadd.f32 %v923, %v1115
        %v1117 = vpop.f32.mrf.mxu0
        %v1118 = vadd.f32 %v925, %v1117
        %1119 = vdwg.mxu0
        %1120 = vmatprep.subr.mxu0 0.0
        %v1121 = vand.u32 %v411, 4294901760
        %1122 = vmatpush1.xpose.msra.mxu0 %v1121
        %1123 = vmatprep.subr.mxu0 0.0
        %v1124 = vand.u32 %v408, 4294901760
        %1125 = vmatpush1.xpose.msra.mxu0 %v1124
        %1126 = vmatprep.subr.mxu0 0.0
        %v1127 = vand.u32 %v405, 4294901760
        %1128 = vmatpush1.xpose.msra.mxu0 %v1127
        %1129 = vmatprep.subr.mxu0 0.0
        %v1130 = vand.u32 %v402, 4294901760
        %1131 = vmatpush1.xpose.msra.mxu0 %v1130
        %1132 = vmatprep.subr.mxu0 0.0
        %v1133 = vand.u32 %v399, 4294901760
        %1134 = vmatpush1.xpose.msra.mxu0 %v1133
        %1135 = vmatprep.subr.mxu0 0.0
        %v1136 = vand.u32 %v396, 4294901760
        %1137 = vmatpush1.xpose.msra.mxu0 %v1136
        %1138 = vmatprep.subr.mxu0 0.0
        %v1139 = vand.u32 %v393, 4294901760
        %1140 = vmatpush1.xpose.msra.mxu0 %v1139
        %1141 = vmatprep.subr.mxu0 0.0
        %v1142 = vand.u32 %v390, 4294901760
        %1143 = vmatpush1.xpose.msra.mxu0 %v1142
        %1144 = vmatprep.subr.mxu0 0.0
        %v1145 = vand.u32 %v387, 4294901760
        %1146 = vmatpush1.xpose.msra.mxu0 %v1145
        %1147 = vmatprep.subr.mxu0 0.0
        %v1148 = vand.u32 %v384, 4294901760
        %1149 = vmatpush1.xpose.msra.mxu0 %v1148
        %1150 = vmatprep.subr.mxu0 0.0
        %v1151 = vand.u32 %v381, 4294901760
        %1152 = vmatpush1.xpose.msra.mxu0 %v1151
        %1153 = vmatprep.subr.mxu0 0.0
        %v1154 = vand.u32 %v378, 4294901760
        %1155 = vmatpush1.xpose.msra.mxu0 %v1154
        %1156 = vmatprep.subr.mxu0 0.0
        %v1157 = vand.u32 %v375, 4294901760
        %1158 = vmatpush1.xpose.msra.mxu0 %v1157
        %1159 = vmatprep.subr.mxu0 0.0
        %v1160 = vand.u32 %v372, 4294901760
        %1161 = vmatpush1.xpose.msra.mxu0 %v1160
        %1162 = vmatprep.subr.mxu0 0.0
        %v1163 = vand.u32 %v369, 4294901760
        %1164 = vmatpush1.xpose.msra.mxu0 %v1163
        %1165 = vmatprep.subr.mxu0 0.0
        %v1166 = vand.u32 %v366, 4294901760
        %1167 = vmatpush1.xpose.msra.mxu0 %v1166
        %1168 = vmatprep.subr.mxu0 0.0
        %v1169 = vand.u32 %v459, 4294901760
        %1170 = vmatpush2.xpose.msra.mxu0 %v1169
        %1171 = vmatprep.subr.mxu0 0.0
        %v1172 = vand.u32 %v456, 4294901760
        %1173 = vmatpush2.xpose.msra.mxu0 %v1172
        %1174 = vmatprep.subr.mxu0 0.0
        %v1175 = vand.u32 %v453, 4294901760
        %1176 = vmatpush2.xpose.msra.mxu0 %v1175
        %1177 = vmatprep.subr.mxu0 0.0
        %v1178 = vand.u32 %v450, 4294901760
        %1179 = vmatpush2.xpose.msra.mxu0 %v1178
        %1180 = vmatprep.subr.mxu0 0.0
        %v1181 = vand.u32 %v447, 4294901760
        %1182 = vmatpush2.xpose.msra.mxu0 %v1181
        %1183 = vmatprep.subr.mxu0 0.0
        %v1184 = vand.u32 %v444, 4294901760
        %1185 = vmatpush2.xpose.msra.mxu0 %v1184
        %1186 = vmatprep.subr.mxu0 0.0
        %v1187 = vand.u32 %v441, 4294901760
        %1188 = vmatpush2.xpose.msra.mxu0 %v1187
        %1189 = vmatprep.subr.mxu0 0.0
        %v1190 = vand.u32 %v438, 4294901760
        %1191 = vmatpush2.xpose.msra.mxu0 %v1190
        %1192 = vmatprep.subr.mxu0 0.0
        %v1193 = vand.u32 %v435, 4294901760
        %1194 = vmatpush2.xpose.msra.mxu0 %v1193
        %1195 = vmatprep.subr.mxu0 0.0
        %v1196 = vand.u32 %v432, 4294901760
        %1197 = vmatpush2.xpose.msra.mxu0 %v1196
        %1198 = vmatprep.subr.mxu0 0.0
        %v1199 = vand.u32 %v429, 4294901760
        %1200 = vmatpush2.xpose.msra.mxu0 %v1199
        %1201 = vmatprep.subr.mxu0 0.0
        %v1202 = vand.u32 %v426, 4294901760
        %1203 = vmatpush2.xpose.msra.mxu0 %v1202
        %1204 = vmatprep.subr.mxu0 0.0
        %v1205 = vand.u32 %v423, 4294901760
        %1206 = vmatpush2.xpose.msra.mxu0 %v1205
        %1207 = vmatprep.subr.mxu0 0.0
        %v1208 = vand.u32 %v420, 4294901760
        %1209 = vmatpush2.xpose.msra.mxu0 %v1208
        %1210 = vmatprep.subr.mxu0 0.0
        %v1211 = vand.u32 %v417, 4294901760
        %1212 = vmatpush2.xpose.msra.mxu0 %v1211
        %1213 = vmatprep.subr.mxu0 0.0
        %v1214 = vand.u32 %v414, 4294901760
        %1215 = vmatpush2.xpose.msra.mxu0 %v1214
        %1216 = vmatprep.mubr.f32.mxu0 0.0
        %v1217 = vand.u32 %v342, 4294901760
        %v1218 = vsub.f32 %v342, %v1217
        %v1219 = vand.u32 %v1218, 4294901760
        %1220 = vmatmul.mubr.f32.gmra.mxu0 %v1219
        %v1221 = vpop.f32.mrf.mxu0
        %v1222 = vadd.f32 %v1060, %v1221
        %v1223 = vpop.f32.mrf.mxu0
        %v1224 = vadd.f32 %v1062, %v1223
        %1225 = vmatprep.mubr.f32.mxu0 0.0
        %v1226 = vand.u32 %v345, 4294901760
        %v1227 = vsub.f32 %v345, %v1226
        %v1228 = vand.u32 %v1227, 4294901760
        %1229 = vmatmul.mubr.f32.gmra.mxu0 %v1228
        %v1230 = vpop.f32.mrf.mxu0
        %v1231 = vadd.f32 %v1068, %v1230
        %v1232 = vpop.f32.mrf.mxu0
        %v1233 = vadd.f32 %v1070, %v1232
        %1234 = vmatprep.mubr.f32.mxu0 0.0
        %v1235 = vand.u32 %v348, 4294901760
        %v1236 = vsub.f32 %v348, %v1235
        %v1237 = vand.u32 %v1236, 4294901760
        %1238 = vmatmul.mubr.f32.gmra.mxu0 %v1237
        %v1239 = vpop.f32.mrf.mxu0
        %v1240 = vadd.f32 %v1076, %v1239
        %v1241 = vpop.f32.mrf.mxu0
        %v1242 = vadd.f32 %v1078, %v1241
        %1243 = vmatprep.mubr.f32.mxu0 0.0
        %v1244 = vand.u32 %v351, 4294901760
        %v1245 = vsub.f32 %v351, %v1244
        %v1246 = vand.u32 %v1245, 4294901760
        %1247 = vmatmul.mubr.f32.gmra.mxu0 %v1246
        %v1248 = vpop.f32.mrf.mxu0
        %v1249 = vadd.f32 %v1084, %v1248
        %v1250 = vpop.f32.mrf.mxu0
        %v1251 = vadd.f32 %v1086, %v1250
        %1252 = vmatprep.mubr.f32.mxu0 0.0
        %v1253 = vand.u32 %v354, 4294901760
        %v1254 = vsub.f32 %v354, %v1253
        %v1255 = vand.u32 %v1254, 4294901760
        %1256 = vmatmul.mubr.f32.gmra.mxu0 %v1255
        %v1257 = vpop.f32.mrf.mxu0
        %v1258 = vadd.f32 %v1092, %v1257
        %v1259 = vpop.f32.mrf.mxu0
        %v1260 = vadd.f32 %v1094, %v1259
        %1261 = vmatprep.mubr.f32.mxu0 0.0
        %v1262 = vand.u32 %v357, 4294901760
        %v1263 = vsub.f32 %v357, %v1262
        %v1264 = vand.u32 %v1263, 4294901760
        %1265 = vmatmul.mubr.f32.gmra.mxu0 %v1264
        %v1266 = vpop.f32.mrf.mxu0
        %v1267 = vadd.f32 %v1100, %v1266
        %v1268 = vpop.f32.mrf.mxu0
        %v1269 = vadd.f32 %v1102, %v1268
        %1270 = vmatprep.mubr.f32.mxu0 0.0
        %v1271 = vand.u32 %v360, 4294901760
        %v1272 = vsub.f32 %v360, %v1271
        %v1273 = vand.u32 %v1272, 4294901760
        %1274 = vmatmul.mubr.f32.gmra.mxu0 %v1273
        %v1275 = vpop.f32.mrf.mxu0
        %v1276 = vadd.f32 %v1108, %v1275
        %v1277 = vpop.f32.mrf.mxu0
        %v1278 = vadd.f32 %v1110, %v1277
        %1279 = vmatprep.mubr.f32.mxu0 0.0
        %v1280 = vand.u32 %v363, 4294901760
        %v1281 = vsub.f32 %v363, %v1280
        %v1282 = vand.u32 %v1281, 4294901760
        %1283 = vmatmul.mubr.f32.gmra.mxu0 %v1282
        %v1284 = vpop.f32.mrf.mxu0
        %v1285 = vadd.f32 %v1116, %v1284
        %v1286 = vpop.f32.mrf.mxu0
        %v1287 = vadd.f32 %v1118, %v1286
        %1288 = vdwg.mxu0
        %1289 = vmatprep.subr.mxu0 0.0
        %v1290 = vand.u32 %v411, 4294901760
        %v1291 = vsub.f32 %v411, %v1290
        %v1292 = vand.u32 %v1291, 4294901760
        %1293 = vmatpush1.xpose.msra.mxu0 %v1292
        %1294 = vmatprep.subr.mxu0 0.0
        %v1295 = vand.u32 %v408, 4294901760
        %v1296 = vsub.f32 %v408, %v1295
        %v1297 = vand.u32 %v1296, 4294901760
        %1298 = vmatpush1.xpose.msra.mxu0 %v1297
        %1299 = vmatprep.subr.mxu0 0.0
        %v1300 = vand.u32 %v405, 4294901760
        %v1301 = vsub.f32 %v405, %v1300
        %v1302 = vand.u32 %v1301, 4294901760
        %1303 = vmatpush1.xpose.msra.mxu0 %v1302
        %1304 = vmatprep.subr.mxu0 0.0
        %v1305 = vand.u32 %v402, 4294901760
        %v1306 = vsub.f32 %v402, %v1305
        %v1307 = vand.u32 %v1306, 4294901760
        %1308 = vmatpush1.xpose.msra.mxu0 %v1307
        %1309 = vmatprep.subr.mxu0 0.0
        %v1310 = vand.u32 %v399, 4294901760
        %v1311 = vsub.f32 %v399, %v1310
        %v1312 = vand.u32 %v1311, 4294901760
        %1313 = vmatpush1.xpose.msra.mxu0 %v1312
        %1314 = vmatprep.subr.mxu0 0.0
        %v1315 = vand.u32 %v396, 4294901760
        %v1316 = vsub.f32 %v396, %v1315
        %v1317 = vand.u32 %v1316, 4294901760
        %1318 = vmatpush1.xpose.msra.mxu0 %v1317
        %1319 = vmatprep.subr.mxu0 0.0
        %v1320 = vand.u32 %v393, 4294901760
        %v1321 = vsub.f32 %v393, %v1320
        %v1322 = vand.u32 %v1321, 4294901760
        %1323 = vmatpush1.xpose.msra.mxu0 %v1322
        %1324 = vmatprep.subr.mxu0 0.0
        %v1325 = vand.u32 %v390, 4294901760
        %v1326 = vsub.f32 %v390, %v1325
        %v1327 = vand.u32 %v1326, 4294901760
        %1328 = vmatpush1.xpose.msra.mxu0 %v1327
        %1329 = vmatprep.subr.mxu0 0.0
        %v1330 = vand.u32 %v387, 4294901760
        %v1331 = vsub.f32 %v387, %v1330
        %v1332 = vand.u32 %v1331, 4294901760
        %1333 = vmatpush1.xpose.msra.mxu0 %v1332
        %1334 = vmatprep.subr.mxu0 0.0
        %v1335 = vand.u32 %v384, 4294901760
        %v1336 = vsub.f32 %v384, %v1335
        %v1337 = vand.u32 %v1336, 4294901760
        %1338 = vmatpush1.xpose.msra.mxu0 %v1337
        %1339 = vmatprep.subr.mxu0 0.0
        %v1340 = vand.u32 %v381, 4294901760
        %v1341 = vsub.f32 %v381, %v1340
        %v1342 = vand.u32 %v1341, 4294901760
        %1343 = vmatpush1.xpose.msra.mxu0 %v1342
        %1344 = vmatprep.subr.mxu0 0.0
        %v1345 = vand.u32 %v378, 4294901760
        %v1346 = vsub.f32 %v378, %v1345
        %v1347 = vand.u32 %v1346, 4294901760
        %1348 = vmatpush1.xpose.msra.mxu0 %v1347
        %1349 = vmatprep.subr.mxu0 0.0
        %v1350 = vand.u32 %v375, 4294901760
        %v1351 = vsub.f32 %v375, %v1350
        %v1352 = vand.u32 %v1351, 4294901760
        %1353 = vmatpush1.xpose.msra.mxu0 %v1352
        %1354 = vmatprep.subr.mxu0 0.0
        %v1355 = vand.u32 %v372, 4294901760
        %v1356 = vsub.f32 %v372, %v1355
        %v1357 = vand.u32 %v1356, 4294901760
        %1358 = vmatpush1.xpose.msra.mxu0 %v1357
        %1359 = vmatprep.subr.mxu0 0.0
        %v1360 = vand.u32 %v369, 4294901760
        %v1361 = vsub.f32 %v369, %v1360
        %v1362 = vand.u32 %v1361, 4294901760
        %1363 = vmatpush1.xpose.msra.mxu0 %v1362
        %1364 = vmatprep.subr.mxu0 0.0
        %v1365 = vand.u32 %v366, 4294901760
        %v1366 = vsub.f32 %v366, %v1365
        %v1367 = vand.u32 %v1366, 4294901760
        %1368 = vmatpush1.xpose.msra.mxu0 %v1367
        %1369 = vmatprep.subr.mxu0 0.0
        %v1370 = vand.u32 %v459, 4294901760
        %v1371 = vsub.f32 %v459, %v1370
        %v1372 = vand.u32 %v1371, 4294901760
        %1373 = vmatpush2.xpose.msra.mxu0 %v1372
        %1374 = vmatprep.subr.mxu0 0.0
        %v1375 = vand.u32 %v456, 4294901760
        %v1376 = vsub.f32 %v456, %v1375
        %v1377 = vand.u32 %v1376, 4294901760
        %1378 = vmatpush2.xpose.msra.mxu0 %v1377
        %1379 = vmatprep.subr.mxu0 0.0
        %v1380 = vand.u32 %v453, 4294901760
        %v1381 = vsub.f32 %v453, %v1380
        %v1382 = vand.u32 %v1381, 4294901760
        %1383 = vmatpush2.xpose.msra.mxu0 %v1382
        %1384 = vmatprep.subr.mxu0 0.0
        %v1385 = vand.u32 %v450, 4294901760
        %v1386 = vsub.f32 %v450, %v1385
        %v1387 = vand.u32 %v1386, 4294901760
        %1388 = vmatpush2.xpose.msra.mxu0 %v1387
        %1389 = vmatprep.subr.mxu0 0.0
        %v1390 = vand.u32 %v447, 4294901760
        %v1391 = vsub.f32 %v447, %v1390
        %v1392 = vand.u32 %v1391, 4294901760
        %1393 = vmatpush2.xpose.msra.mxu0 %v1392
        %1394 = vmatprep.subr.mxu0 0.0
        %v1395 = vand.u32 %v444, 4294901760
        %v1396 = vsub.f32 %v444, %v1395
        %v1397 = vand.u32 %v1396, 4294901760
        %1398 = vmatpush2.xpose.msra.mxu0 %v1397
        %1399 = vmatprep.subr.mxu0 0.0
        %v1400 = vand.u32 %v441, 4294901760
        %v1401 = vsub.f32 %v441, %v1400
        %v1402 = vand.u32 %v1401, 4294901760
        %1403 = vmatpush2.xpose.msra.mxu0 %v1402
        %1404 = vmatprep.subr.mxu0 0.0
        %v1405 = vand.u32 %v438, 4294901760
        %v1406 = vsub.f32 %v438, %v1405
        %v1407 = vand.u32 %v1406, 4294901760
        %1408 = vmatpush2.xpose.msra.mxu0 %v1407
        %1409 = vmatprep.subr.mxu0 0.0
        %v1410 = vand.u32 %v435, 4294901760
        %v1411 = vsub.f32 %v435, %v1410
        %v1412 = vand.u32 %v1411, 4294901760
        %1413 = vmatpush2.xpose.msra.mxu0 %v1412
        %1414 = vmatprep.subr.mxu0 0.0
        %v1415 = vand.u32 %v432, 4294901760
        %v1416 = vsub.f32 %v432, %v1415
        %v1417 = vand.u32 %v1416, 4294901760
        %1418 = vmatpush2.xpose.msra.mxu0 %v1417
        %1419 = vmatprep.subr.mxu0 0.0
        %v1420 = vand.u32 %v429, 4294901760
        %v1421 = vsub.f32 %v429, %v1420
        %v1422 = vand.u32 %v1421, 4294901760
        %1423 = vmatpush2.xpose.msra.mxu0 %v1422
        %1424 = vmatprep.subr.mxu0 0.0
        %v1425 = vand.u32 %v426, 4294901760
        %v1426 = vsub.f32 %v426, %v1425
        %v1427 = vand.u32 %v1426, 4294901760
        %1428 = vmatpush2.xpose.msra.mxu0 %v1427
        %1429 = vmatprep.subr.mxu0 0.0
        %v1430 = vand.u32 %v423, 4294901760
        %v1431 = vsub.f32 %v423, %v1430
        %v1432 = vand.u32 %v1431, 4294901760
        %1433 = vmatpush2.xpose.msra.mxu0 %v1432
        %1434 = vmatprep.subr.mxu0 0.0
        %v1435 = vand.u32 %v420, 4294901760
        %v1436 = vsub.f32 %v420, %v1435
        %v1437 = vand.u32 %v1436, 4294901760
        %1438 = vmatpush2.xpose.msra.mxu0 %v1437
        %1439 = vmatprep.subr.mxu0 0.0
        %v1440 = vand.u32 %v417, 4294901760
        %v1441 = vsub.f32 %v417, %v1440
        %v1442 = vand.u32 %v1441, 4294901760
        %1443 = vmatpush2.xpose.msra.mxu0 %v1442
        %1444 = vmatprep.subr.mxu0 0.0
        %v1445 = vand.u32 %v414, 4294901760
        %v1446 = vsub.f32 %v414, %v1445
        %v1447 = vand.u32 %v1446, 4294901760
        %1448 = vmatpush2.xpose.msra.mxu0 %v1447
        %1449 = vmatprep.mubr.f32.mxu0 0.0
        %v1450 = vand.u32 %v342, 4294901760
        %1451 = vmatmul.mubr.f32.gmra.mxu0 %v1450
        %v1452 = vpop.f32.mrf.mxu0
        %v1453 = vadd.f32 %v1222, %v1452
        %v1454 = vpop.f32.mrf.mxu0
        %v1455 = vadd.f32 %v1224, %v1454
        %1456 = vmatprep.mubr.f32.mxu0 0.0
        %v1457 = vand.u32 %v345, 4294901760
        %1458 = vmatmul.mubr.f32.gmra.mxu0 %v1457
        %v1459 = vpop.f32.mrf.mxu0
        %v1460 = vadd.f32 %v1231, %v1459
        %v1461 = vpop.f32.mrf.mxu0
        %v1462 = vadd.f32 %v1233, %v1461
        %1463 = vmatprep.mubr.f32.mxu0 0.0
        %v1464 = vand.u32 %v348, 4294901760
        %1465 = vmatmul.mubr.f32.gmra.mxu0 %v1464
        %v1466 = vpop.f32.mrf.mxu0
        %v1467 = vadd.f32 %v1240, %v1466
        %v1468 = vpop.f32.mrf.mxu0
        %v1469 = vadd.f32 %v1242, %v1468
        %1470 = vmatprep.mubr.f32.mxu0 0.0
        %v1471 = vand.u32 %v351, 4294901760
        %1472 = vmatmul.mubr.f32.gmra.mxu0 %v1471
        %v1473 = vpop.f32.mrf.mxu0
        %v1474 = vadd.f32 %v1249, %v1473
        %v1475 = vpop.f32.mrf.mxu0
        %v1476 = vadd.f32 %v1251, %v1475
        %1477 = vmatprep.mubr.f32.mxu0 0.0
        %v1478 = vand.u32 %v354, 4294901760
        %1479 = vmatmul.mubr.f32.gmra.mxu0 %v1478
        %v1480 = vpop.f32.mrf.mxu0
        %v1481 = vadd.f32 %v1258, %v1480
        %v1482 = vpop.f32.mrf.mxu0
        %v1483 = vadd.f32 %v1260, %v1482
        %1484 = vmatprep.mubr.f32.mxu0 0.0
        %v1485 = vand.u32 %v357, 4294901760
        %1486 = vmatmul.mubr.f32.gmra.mxu0 %v1485
        %v1487 = vpop.f32.mrf.mxu0
        %v1488 = vadd.f32 %v1267, %v1487
        %v1489 = vpop.f32.mrf.mxu0
        %v1490 = vadd.f32 %v1269, %v1489
        %1491 = vmatprep.mubr.f32.mxu0 0.0
        %v1492 = vand.u32 %v360, 4294901760
        %1493 = vmatmul.mubr.f32.gmra.mxu0 %v1492
        %v1494 = vpop.f32.mrf.mxu0
        %v1495 = vadd.f32 %v1276, %v1494
        %v1496 = vpop.f32.mrf.mxu0
        %v1497 = vadd.f32 %v1278, %v1496
        %1498 = vmatprep.mubr.f32.mxu0 0.0
        %v1499 = vand.u32 %v363, 4294901760
        %1500 = vmatmul.mubr.f32.gmra.mxu0 %v1499
        %v1501 = vpop.f32.mrf.mxu0
        %v1502 = vadd.f32 %v1285, %v1501
        %v1503 = vpop.f32.mrf.mxu0
        %v1504 = vadd.f32 %v1287, %v1503
        %1505 = vdwg.mxu0
        %1506 = vmatprep.subr.mxu0 0.0
        %v1507 = vand.u32 %v411, 4294901760
        %1508 = vmatpush1.xpose.msra.mxu0 %v1507
        %1509 = vmatprep.subr.mxu0 0.0
        %v1510 = vand.u32 %v408, 4294901760
        %1511 = vmatpush1.xpose.msra.mxu0 %v1510
        %1512 = vmatprep.subr.mxu0 0.0
        %v1513 = vand.u32 %v405, 4294901760
        %1514 = vmatpush1.xpose.msra.mxu0 %v1513
        %1515 = vmatprep.subr.mxu0 0.0
        %v1516 = vand.u32 %v402, 4294901760
        %1517 = vmatpush1.xpose.msra.mxu0 %v1516
        %1518 = vmatprep.subr.mxu0 0.0
        %v1519 = vand.u32 %v399, 4294901760
        %1520 = vmatpush1.xpose.msra.mxu0 %v1519
        %1521 = vmatprep.subr.mxu0 0.0
        %v1522 = vand.u32 %v396, 4294901760
        %1523 = vmatpush1.xpose.msra.mxu0 %v1522
        %1524 = vmatprep.subr.mxu0 0.0
        %v1525 = vand.u32 %v393, 4294901760
        %1526 = vmatpush1.xpose.msra.mxu0 %v1525
        %1527 = vmatprep.subr.mxu0 0.0
        %v1528 = vand.u32 %v390, 4294901760
        %1529 = vmatpush1.xpose.msra.mxu0 %v1528
        %1530 = vmatprep.subr.mxu0 0.0
        %v1531 = vand.u32 %v387, 4294901760
        %1532 = vmatpush1.xpose.msra.mxu0 %v1531
        %1533 = vmatprep.subr.mxu0 0.0
        %v1534 = vand.u32 %v384, 4294901760
        %1535 = vmatpush1.xpose.msra.mxu0 %v1534
        %1536 = vmatprep.subr.mxu0 0.0
        %v1537 = vand.u32 %v381, 4294901760
        %1538 = vmatpush1.xpose.msra.mxu0 %v1537
        %1539 = vmatprep.subr.mxu0 0.0
        %v1540 = vand.u32 %v378, 4294901760
        %1541 = vmatpush1.xpose.msra.mxu0 %v1540
        %1542 = vmatprep.subr.mxu0 0.0
        %v1543 = vand.u32 %v375, 4294901760
        %1544 = vmatpush1.xpose.msra.mxu0 %v1543
        %1545 = vmatprep.subr.mxu0 0.0
        %v1546 = vand.u32 %v372, 4294901760
        %1547 = vmatpush1.xpose.msra.mxu0 %v1546
        %1548 = vmatprep.subr.mxu0 0.0
        %v1549 = vand.u32 %v369, 4294901760
        %1550 = vmatpush1.xpose.msra.mxu0 %v1549
        %1551 = vmatprep.subr.mxu0 0.0
        %v1552 = vand.u32 %v366, 4294901760
        %1553 = vmatpush1.xpose.msra.mxu0 %v1552
        %1554 = vmatprep.subr.mxu0 0.0
        %v1555 = vand.u32 %v459, 4294901760
        %1556 = vmatpush2.xpose.msra.mxu0 %v1555
        %1557 = vmatprep.subr.mxu0 0.0
        %v1558 = vand.u32 %v456, 4294901760
        %1559 = vmatpush2.xpose.msra.mxu0 %v1558
        %1560 = vmatprep.subr.mxu0 0.0
        %v1561 = vand.u32 %v453, 4294901760
        %1562 = vmatpush2.xpose.msra.mxu0 %v1561
        %1563 = vmatprep.subr.mxu0 0.0
        %v1564 = vand.u32 %v450, 4294901760
        %1565 = vmatpush2.xpose.msra.mxu0 %v1564
        %1566 = vmatprep.subr.mxu0 0.0
        %v1567 = vand.u32 %v447, 4294901760
        %1568 = vmatpush2.xpose.msra.mxu0 %v1567
        %1569 = vmatprep.subr.mxu0 0.0
        %v1570 = vand.u32 %v444, 4294901760
        %1571 = vmatpush2.xpose.msra.mxu0 %v1570
        %1572 = vmatprep.subr.mxu0 0.0
        %v1573 = vand.u32 %v441, 4294901760
        %1574 = vmatpush2.xpose.msra.mxu0 %v1573
        %1575 = vmatprep.subr.mxu0 0.0
        %v1576 = vand.u32 %v438, 4294901760
        %1577 = vmatpush2.xpose.msra.mxu0 %v1576
        %1578 = vmatprep.subr.mxu0 0.0
        %v1579 = vand.u32 %v435, 4294901760
        %1580 = vmatpush2.xpose.msra.mxu0 %v1579
        %1581 = vmatprep.subr.mxu0 0.0
        %v1582 = vand.u32 %v432, 4294901760
        %1583 = vmatpush2.xpose.msra.mxu0 %v1582
        %1584 = vmatprep.subr.mxu0 0.0
        %v1585 = vand.u32 %v429, 4294901760
        %1586 = vmatpush2.xpose.msra.mxu0 %v1585
        %1587 = vmatprep.subr.mxu0 0.0
        %v1588 = vand.u32 %v426, 4294901760
        %1589 = vmatpush2.xpose.msra.mxu0 %v1588
        %1590 = vmatprep.subr.mxu0 0.0
        %v1591 = vand.u32 %v423, 4294901760
        %1592 = vmatpush2.xpose.msra.mxu0 %v1591
        %1593 = vmatprep.subr.mxu0 0.0
        %v1594 = vand.u32 %v420, 4294901760
        %1595 = vmatpush2.xpose.msra.mxu0 %v1594
        %1596 = vmatprep.subr.mxu0 0.0
        %v1597 = vand.u32 %v417, 4294901760
        %1598 = vmatpush2.xpose.msra.mxu0 %v1597
        %1599 = vmatprep.subr.mxu0 0.0
        %v1600 = vand.u32 %v414, 4294901760
        %1601 = vmatpush2.xpose.msra.mxu0 %v1600
        %1602 = vmatprep.mubr.f32.mxu0 0.0
        %v1603 = vand.u32 %v342, 4294901760
        %1604 = vmatmul.mubr.f32.gmra.mxu0 %v1603
        %v1605 = vpop.f32.mrf.mxu0
        %v1606 = vadd.f32 %v1453, %v1605
        %v1607 = vpop.f32.mrf.mxu0
        %v1608 = vadd.f32 %v1455, %v1607
        %1609 = vmatprep.mubr.f32.mxu0 0.0
        %v1610 = vand.u32 %v345, 4294901760
        %1611 = vmatmul.mubr.f32.gmra.mxu0 %v1610
        %v1612 = vpop.f32.mrf.mxu0
        %v1613 = vadd.f32 %v1460, %v1612
        %v1614 = vpop.f32.mrf.mxu0
        %v1615 = vadd.f32 %v1462, %v1614
        %1616 = vmatprep.mubr.f32.mxu0 0.0
        %v1617 = vand.u32 %v348, 4294901760
        %1618 = vmatmul.mubr.f32.gmra.mxu0 %v1617
        %v1619 = vpop.f32.mrf.mxu0
        %v1620 = vadd.f32 %v1467, %v1619
        %v1621 = vpop.f32.mrf.mxu0
        %v1622 = vadd.f32 %v1469, %v1621
        %1623 = vmatprep.mubr.f32.mxu0 0.0
        %v1624 = vand.u32 %v351, 4294901760
        %1625 = vmatmul.mubr.f32.gmra.mxu0 %v1624
        %v1626 = vpop.f32.mrf.mxu0
        %v1627 = vadd.f32 %v1474, %v1626
        %v1628 = vpop.f32.mrf.mxu0
        %v1629 = vadd.f32 %v1476, %v1628
        %1630 = vmatprep.mubr.f32.mxu0 0.0
        %v1631 = vand.u32 %v354, 4294901760
        %1632 = vmatmul.mubr.f32.gmra.mxu0 %v1631
        %v1633 = vpop.f32.mrf.mxu0
        %v1634 = vadd.f32 %v1481, %v1633
        %v1635 = vpop.f32.mrf.mxu0
        %v1636 = vadd.f32 %v1483, %v1635
        %1637 = vmatprep.mubr.f32.mxu0 0.0
        %v1638 = vand.u32 %v357, 4294901760
        %1639 = vmatmul.mubr.f32.gmra.mxu0 %v1638
        %v1640 = vpop.f32.mrf.mxu0
        %v1641 = vadd.f32 %v1488, %v1640
        %v1642 = vpop.f32.mrf.mxu0
        %v1643 = vadd.f32 %v1490, %v1642
        %1644 = vmatprep.mubr.f32.mxu0 0.0
        %v1645 = vand.u32 %v360, 4294901760
        %1646 = vmatmul.mubr.f32.gmra.mxu0 %v1645
        %v1647 = vpop.f32.mrf.mxu0
        %v1648 = vadd.f32 %v1495, %v1647
        %v1649 = vpop.f32.mrf.mxu0
        %v1650 = vadd.f32 %v1497, %v1649
        %1651 = vmatprep.mubr.f32.mxu0 0.0
        %v1652 = vand.u32 %v363, 4294901760
        %1653 = vmatmul.mubr.f32.gmra.mxu0 %v1652
        %v1654 = vpop.f32.mrf.mxu0
        %v1655 = vadd.f32 %v1502, %v1654
        %v1656 = vpop.f32.mrf.mxu0
        %v1657 = vadd.f32 %v1504, %v1656
        %1658 = vdwg.mxu0
        %v1659 = vmax.f32 %v1606, 0.0
        %v1660 = vmax.f32 %v1608, 0.0
        %v1661 = vmax.f32 %v1613, 0.0
        %v1662 = vmax.f32 %v1615, 0.0
        %v1663 = vmax.f32 %v1620, 0.0
        %v1664 = vmax.f32 %v1622, 0.0
        %v1665 = vmax.f32 %v1627, 0.0
        %v1666 = vmax.f32 %v1629, 0.0
        %v1667 = vmax.f32 %v1634, 0.0
        %v1668 = vmax.f32 %v1636, 0.0
        %v1669 = vmax.f32 %v1641, 0.0
        %v1670 = vmax.f32 %v1643, 0.0
        %v1671 = vmax.f32 %v1648, 0.0
        %v1672 = vmax.f32 %v1650, 0.0
        %v1673 = vmax.f32 %v1655, 0.0
        %v1674 = vmax.f32 %v1657, 0.0
        %v1675 = vld [vmem:[%s3] sm:$0xff]
        %v1676 = vld [vmem:[%s3 + $0x8] sm:$0xff]
        %v1677 = vld [vmem:[%s3 + $0x10] sm:$0xff]
        %v1678 = vld [vmem:[%s3 + $0x18] sm:$0xff]
        %v1679 = vld [vmem:[%s3 + $0x20] sm:$0xff]
        %v1680 = vld [vmem:[%s3 + $0x28] sm:$0xff]
        %v1681 = vld [vmem:[%s3 + $0x30] sm:$0xff]
        %v1682 = vld [vmem:[%s3 + $0x38] sm:$0xff]
        %1684 = vset.pattern.permute.xlu0 0
        %1685 = vperm.xlu0 %1684, %v1675
        %v1686 = vpop.permute.xlu0 %1685
        %1689 = vset.pattern.permute.xlu0 0
        %1690 = vperm.xlu0 %1689, %v1676
        %v1691 = vpop.permute.xlu0 %1690
        %1694 = vset.pattern.permute.xlu0 0
        %1695 = vperm.xlu0 %1694, %v1677
        %v1696 = vpop.permute.xlu0 %1695
        %1699 = vset.pattern.permute.xlu0 0
        %1700 = vperm.xlu0 %1699, %v1678
        %v1701 = vpop.permute.xlu0 %1700
        %1704 = vset.pattern.permute.xlu0 0
        %1705 = vperm.xlu0 %1704, %v1679
        %v1706 = vpop.permute.xlu0 %1705
        %1709 = vset.pattern.permute.xlu0 0
        %1710 = vperm.xlu0 %1709, %v1680
        %v1711 = vpop.permute.xlu0 %1710
        %1714 = vset.pattern.permute.xlu0 0
        %1715 = vperm.xlu0 %1714, %v1681
        %v1716 = vpop.permute.xlu0 %1715
        %1719 = vset.pattern.permute.xlu0 0
        %1720 = vperm.xlu0 %1719, %v1682
        %v1721 = vpop.permute.xlu0 %1720
        %v1723 = vmul.f32 %v1659, %v1686
        %v1724 = vmul.f32 %v1660, %v1686
        %v1725 = vmul.f32 %v1661, %v1691
        %v1726 = vmul.f32 %v1662, %v1691
        %v1727 = vmul.f32 %v1663, %v1696
        %v1728 = vmul.f32 %v1664, %v1696
        %v1729 = vmul.f32 %v1665, %v1701
        %v1730 = vmul.f32 %v1666, %v1701
        %v1731 = vmul.f32 %v1667, %v1706
        %v1732 = vmul.f32 %v1668, %v1706
        %v1733 = vmul.f32 %v1669, %v1711
        %v1734 = vmul.f32 %v1670, %v1711
        %v1735 = vmul.f32 %v1671, %v1716
        %v1736 = vmul.f32 %v1672, %v1716
        %v1737 = vmul.f32 %v1673, %v1721
        %v1738 = vmul.f32 %v1674, %v1721
        %v1739 = vadd.f32 %v1723, %v1725
        %v1740 = vadd.f32 %v1739, %v1727
        %v1741 = vadd.f32 %v1740, %v1729
        %v1742 = vadd.f32 %v1741, %v1731
        %v1743 = vadd.f32 %v1742, %v1733
        %v1744 = vadd.f32 %v1743, %v1735
        %v1745 = vadd.f32 %v1744, %v1737
        %v1746 = vrot.slane %v1745, 4
        %v1747 = vadd.f32 %v1745, %v1746
        %v1748 = vrot.slane %v1747, 2
        %v1749 = vadd.f32 %v1747, %v1748
        %v1750 = vrot.slane %v1749, 1
        %v1751 = vadd.f32 %v1749, %v1750
        %v1752 = vadd.f32 %v1724, %v1726
        %v1753 = vadd.f32 %v1752, %v1728
        %v1754 = vadd.f32 %v1753, %v1730
        %v1755 = vadd.f32 %v1754, %v1732
        %v1756 = vadd.f32 %v1755, %v1734
        %v1757 = vadd.f32 %v1756, %v1736
        %v1758 = vadd.f32 %v1757, %v1738
        %v1759 = vrot.slane %v1758, 4
        %v1760 = vadd.f32 %v1758, %v1759
        %v1761 = vrot.slane %v1760, 2
        %v1762 = vadd.f32 %v1760, %v1761
        %v1763 = vrot.slane %v1762, 1
        %v1764 = vadd.f32 %v1762, %v1763
        %v1765 = vld [vmem:[#allocation2] sm:$0x1]
        %1767 = vset.pattern.permute.xlu0 0
        %1768 = vperm.xlu0 %1767, %v1765
        %v1769 = vpop.permute.xlu0 %1768
        %v1771 = vlaneseq
        %v1772 = vshrl.u32 %v1771, 7
        %v1773 = vsub.s32 0, %v1772
        %v1774 = vrot.slane %v1769, %v1773
        %v1775 = vadd.f32 %v1751, %v1774
        %v1776 = vadd.f32 %v1764, %v1774
        %v1779 = vcombine.low %v1775, %v1776
        %v1781 = vunpack.c.l.s4 1966171168
        %v1782 = vunpack.c.0.s8 %v1781
        %v1783 = vlaneseq
        %v1784 = vshrl.u32 %v1783, 7
        %v1785 = vsub.s32 %v1782, %v1784
        %v1786 = vrot.slane %v1779, %v1785
        %v1788 = vunpack.c.l.s4 1966171168
        %v1789 = vunpack.c.0.s8 %v1788
        %v1790 = vlaneseq
        %v1791 = vshrl.u32 %v1790, 7
        %v1792 = vsub.s32 %v1789, %v1791
        %v1793 = vrot.slane %v1786, %v1792
        %v1795 = vlaneseq
        %vm1796 = vcmp.ge.s32.totalorder %v1795, 0
        %vm1797 = vcmp.lt.s32.totalorder %v1795, 256
        %vm1798 = vmand %vm1796, %vm1797
        %1799 = vst.msk [vmem:[%s232] sm:$0x3] %vm1798, %v1793
        %s1800 = sand.u32 %s139, 1
        %s1801 = scalar_lea.sflag [#allocation4], %s1800
        %s1802 = sand.u32 %s139, 1
        %s1803 = smul.addr %s1802, 2
        %s1804 = scalar_lea.vmem [#allocation3], %s1803
        // Predicated region
        $region41: #{base_model_forward.1} parent=39 // pred_check
          %p1805 = pneg %p149
        $region42: #{base_model_forward.1} parent=39 // pred_check_branch
          %1807 = sbr.rel (%p1805) target = $region44
        $region43: #{base_model_forward.1} parent=39 // pred_region
          %s1808 = smul.u32 2, %s21
          %s1809 = ssub.s32 3, %s1808
          %p1810 = scmp.lt.s32.totalorder %s1809, 2
          %s1811 = scalar_select %p1810, %s1809, 2
          %s1812 = smul.u32 16, %s1811
          %s1814 = ssub.s32 32, %s1812
          %1815 = vsyncadd %s1801, %s1814
          %p1816 = scmp.ne.s32.totalorder 0, %s1812
          %s1817 = smul.addr %s1808, 16
          %s1818 = scalar_lea.hbm %s5, %s1817
          %s1819 = sshll.u32 %s1811, 4
          %s1820 = sshll.u32 %s1804, 4
          %s1821 = int_to_ptr.vmem [resolvable:$true] %s1820
          %1823 = dma.vmem_to_hbm [thread:$0]  (%p1816), %s1821, %s1819, %s1818, %s1801
        $region44: #{base_model_forward.1} parent=39 // pred_fallthru
          _
      $region40: #{base_model_forward.1} parent=5 // pred_fallthru
        _
      %p1824 = scmp.le.s32.totalorder 2, %s16
      // Predicated region
      $region45: #{base_model_forward.1} parent=5 // pred_check
        %p1825 = pneg %p1824
      $region46: #{base_model_forward.1} parent=5 // pred_check_branch
        %1827 = sbr.rel (%p1825) target = $region48
      $region47: #{base_model_forward.1} parent=5 // pred_region
        %s1828 = ssub.s32 %s16, 2
        // Predicated region
        $region49: #{base_model_forward.1} parent=47 // pred_check
          %p1829 = pneg %p155
        $region50: #{base_model_forward.1} parent=47 // pred_check_branch
          %1831 = sbr.rel (%p1829) target = $region52
        $region51: #{base_model_forward.1} parent=47 // pred_region
          %s1832 = sand.u32 %s140, 1
          %s1833 = scalar_lea.sflag [#allocation4], %s1832
          %s1834 = sand.u32 %s140, 1
          %s1835 = smul.addr %s1834, 2
          %s1836 = scalar_lea.vmem [#allocation3], %s1835
          %1837 = dma.done %s1833, 32
        $region52: #{base_model_forward.1} parent=47 // pred_fallthru
          _
      $region48: #{base_model_forward.1} parent=5 // pred_fallthru
        _
    $region6: #{base_model_forward.1} parent=1 // loop_footer
      %s20 = sadd.s32 1, %s16
    $region7: #{base_model_forward.1} parent=1 // loop_footer_branch
      %15 = sbr.rel target = $region3
    $region8: #{base_model_forward.1} parent=1 // loop_exit
      _
    %1838 = vsyncpa [#allocation4], 1
    %s1839 = scalar_lea.sflag [#allocation4], 1
    %1840 = vsyncpa %s1839, 1

</llo_original>
